<compile_context>
chip_gen: v7x
topology: tpu7x:2x2x1
jax: 0.10.0
libtpu: 0.0.40
codegen_flags: <defaults>
</compile_context>

<pallas_src>
import jax
import jax.numpy as jnp
from jax import lax
from jax.experimental import pallas as pl
from jax.experimental.pallas import tpu as pltpu

D_MODEL = 32
NHEAD = 4
HEAD_DIM = D_MODEL // NHEAD
DIM_FF = 64
LN_EPS = 1e-5


def decoder_layer_kernel(tgt_ref, mem_ref,
                         wq_ref, bq_ref, wkv_ref, bkv_ref,
                         wo_ref, bo_ref,
                         w1_ref, b1_ref, w2_ref, b2_ref,
                         g1_ref, be1_ref, g2_ref, be2_ref,
                         out_ref):
    # tgt_ref: (N, T, E)   mem_ref: (N, M, E) with M = S + T (concat done in wrapper)
    # wq_ref: (E, E) q weights pre-scaled by 1/sqrt(d)     bq_ref: (1, E) pre-scaled
    # wkv_ref: (E, 2E) fused K|V weights                   bkv_ref: (1, 2E)
    # wo_ref: (H, d, E) per-head slices of out_proj        bo_ref: (1, E)
    # w1_ref: (E, F) b1_ref: (1, F)   w2_ref: (F, E) b2_ref: (1, E)
    # g1/be1/g2/be2: (1, E)           out_ref: (N, T, E)
    N, T, E = tgt_ref.shape
    M = mem_ref.shape[1]
    H, HD = NHEAD, HEAD_DIM

    # Flatten batch*seq (minor dim E untouched -> no relayout); rows ordered (n, t)/(n, m).
    tgt2d = tgt_ref[...].reshape(N * T, E).astype(jnp.float32)   # (NT, E)
    mem2d = mem_ref[...].reshape(N * M, E).astype(jnp.float32)   # (NM, E)

    # ---- fused projections: 2 lane-dense matmuls instead of 12 per-head dots ----
    q2d = jnp.dot(tgt2d, wq_ref[...],
                  preferred_element_type=jnp.float32) + bq_ref[...]     # (NT, E), pre-scaled
    kv2d = jnp.dot(mem2d, wkv_ref[...],
                   preferred_element_type=jnp.float32) + bkv_ref[...]   # (NM, 2E)

    # ---- regroup into (H*N, seq, d): static 8-lane slices + leading-axis stack ----
    # (cheap copies; avoids 4-D transposes and multi-batch-dim dot_general)
    qb = jnp.stack([q2d[:, h * HD:(h + 1) * HD] for h in range(H)],
                   axis=0).reshape(H * N, T, HD)                         # (H*N, T, d)
    kb = jnp.stack([kv2d[:, h * HD:(h + 1) * HD] for h in range(H)],
                   axis=0).reshape(H * N, M, HD)                         # (H*N, M, d)
    vb = jnp.stack([kv2d[:, E + h * HD:E + (h + 1) * HD] for h in range(H)],
                   axis=0).reshape(H * N, M, HD)                         # (H*N, M, d)

    # ---- attention batched over (head, batch): 1 score einsum, 1 softmax, 1 PV einsum ----
    s = jnp.einsum('btd,bmd->btm', qb, kb,
                   preferred_element_type=jnp.float32)                   # (H*N, T, M)
    s = s - jnp.max(s, axis=-1, keepdims=True)
    p = jnp.exp(s)
    p = p * pl.reciprocal(jnp.sum(p, axis=-1, keepdims=True))            # exact reciprocal
    o = jnp.einsum('btm,bmd->btd', p, vb,
                   preferred_element_type=jnp.float32)                   # (H*N, T, d)

    # ---- output projection: one batched per-head contraction, folded with a short add-tree ----
    o4 = o.reshape(H, N * T, HD)                                         # leading split only
    proj = jnp.einsum('hrd,hde->hre', o4, wo_ref[...],
                      preferred_element_type=jnp.float32)                # (H, NT, E)
    attn2d = proj[0]
    for h in range(1, H):
        attn2d = attn2d + proj[h]
    attn2d = attn2d + bo_ref[...]                                        # (NT, E)

    def layer_norm(v, g, b):
        mu = jnp.mean(v, axis=-1, keepdims=True)
        var = jnp.mean((v - mu) ** 2, axis=-1, keepdims=True)
        return (v - mu) * lax.rsqrt(var + LN_EPS) * g + b

    # ---- residual + LayerNorm1 (dropout1 = identity) ----
    x = layer_norm(tgt2d + attn2d, g1_ref[...], be1_ref[...])

    # ---- feed-forward: linear2(relu(linear1(x)))  (dropout = identity) ----
    h1 = jnp.maximum(jnp.dot(x, w1_ref[...],
                             preferred_element_type=jnp.float32) + b1_ref[...], 0.0)
    ff = jnp.dot(h1, w2_ref[...],
                 preferred_element_type=jnp.float32) + b2_ref[...]

    # ---- residual + LayerNorm2 (dropout2 = identity) ----
    y = layer_norm(x + ff, g2_ref[...], be2_ref[...])

    out_ref[...] = y.reshape(N, T, E).astype(out_ref.dtype)


def _decoder_layer_impl(tgt, memory, params):
    """tgt: (T, N, E), memory: (S, N, E)  (PyTorch seq-first layout).  Returns (T, N, E)."""
    T, N, E = tgt.shape
    S = memory.shape[0]
    M = S + T

    # memory = cat([memory, tgt], dim=0) done ONCE here; go batch-major for the kernel.
    # (few-KiB copy, fused by XLA under jit; kept outside the kernel for lowering safety)
    tgt_b = jnp.transpose(tgt, (1, 0, 2))                                     # (N, T, E)
    mem_b = jnp.transpose(jnp.concatenate([memory, tgt], axis=0), (1, 0, 2))  # (N, M, E)

    scale = HEAD_DIM ** -0.5
    wq = params["in_proj_w"][0:E].T * scale           # fold 1/sqrt(d) into q weights/bias
    bq = params["in_proj_b"][0:E] * scale
    wk = params["in_proj_w"][E:2 * E].T
    wv = params["in_proj_w"][2 * E:3 * E].T
    bk = params["in_proj_b"][E:2 * E]
    bv = params["in_proj_b"][2 * E:3 * E]

    wkv = jnp.concatenate([wk, wv], axis=1)                       # (E, 2E)
    bkv = jnp.concatenate([bk, bv], axis=0).reshape(1, 2 * E)     # (1, 2E)
    wo_h = params["wo"].T.reshape(NHEAD, HEAD_DIM, E)             # (H, d, E)

    kernel_params = [
        wq, bq.reshape(1, E), wkv, bkv,
        wo_h, params["bo"].reshape(1, E),
        params["w1"].T, params["b1"].reshape(1, DIM_FF),
        params["w2"].T, params["b2"].reshape(1, E),
        params["g1"].reshape(1, E), params["be1"].reshape(1, E),
        params["g2"].reshape(1, E), params["be2"].reshape(1, E),
    ]

    def full_spec(shape):
        nd = len(shape)
        return pl.BlockSpec(shape, lambda i, nd=nd: (0,) * nd)

    in_specs = ([full_spec((N, T, E)), full_spec((N, M, E))]
                + [full_spec(p.shape) for p in kernel_params])

    # Single grid step: whole problem is one block -> no per-step pipeline overhead,
    # weights stay resident, one writeback DMA for the output.
    out = pl.pallas_call(
        decoder_layer_kernel,
        out_shape=jax.ShapeDtypeStruct((N, T, E), tgt.dtype),
        grid_spec=pltpu.PrefetchScalarGridSpec(
            num_scalar_prefetch=0,
            grid=(1,),
            in_specs=in_specs,
            out_specs=full_spec((N, T, E)),
        ),
        compiler_params=pltpu.CompilerParams(dimension_semantics=("parallel",)),
    )(tgt_b, mem_b, *kernel_params)

    return jnp.transpose(out, (1, 0, 2))


decoder_layer = jax.jit(_decoder_layer_impl)


# ---------------- pure-JAX reference (for correctness check) ----------------
def decoder_layer_ref(tgt, memory, params):
    T, N, E = tgt.shape
    mem = jnp.concatenate([memory, tgt], axis=0)      # (M, N, E)
    M = mem.shape[0]
    wq, wk, wv = (params["in_proj_w"][0:E], params["in_proj_w"][E:2 * E],
                  params["in_proj_w"][2 * E:3 * E])
    bq, bk, bv = (params["in_proj_b"][0:E], params["in_proj_b"][E:2 * E],
                  params["in_proj_b"][2 * E:3 * E])

    q = tgt @ wq.T + bq
    k = mem @ wk.T + bk
    v = mem @ wv.T + bv
    q = q * (HEAD_DIM ** -0.5)
    qh = q.reshape(T, N, NHEAD, HEAD_DIM)
    kh = k.reshape(M, N, NHEAD, HEAD_DIM)
    vh = v.reshape(M, N, NHEAD, HEAD_DIM)
    s = jnp.einsum("tnhd,mnhd->nhtm", qh, kh)
    p = jax.nn.softmax(s, axis=-1)
    o = jnp.einsum("nhtm,mnhd->tnhd", p, vh).reshape(T, N, E)
    attn = o @ params["wo"].T + params["bo"]

    def ln(x, g, b):
        mu = jnp.mean(x, axis=-1, keepdims=True)
        var = jnp.mean((x - mu) ** 2, axis=-1, keepdims=True)
        return (x - mu) / jnp.sqrt(var + LN_EPS) * g + b

    x = ln(tgt + attn, params["g1"], params["be1"])
    ff = jnp.maximum(x @ params["w1"].T + params["b1"], 0.0) @ params["w2"].T + params["b2"]
    return ln(x + ff, params["g2"], params["be2"])


if __name__ == "__main__":
    # TODO(synk): dropout (attention/FFN/residual) is identity — deterministic eval forward.
    T, S, N, E, F = 8, 8, 2, D_MODEL, DIM_FF

    key = jax.random.PRNGKey(0)
    ks = jax.random.split(key, 14)
    params = {
        "in_proj_w": 0.05 * jax.random.normal(ks[0], (3 * E, E), jnp.float32),
        "in_proj_b": 0.02 * jax.random.normal(ks[1], (3 * E,), jnp.float32),
        "wo": 0.05 * jax.random.normal(ks[2], (E, E), jnp.float32),
        "bo": 0.02 * jax.random.normal(ks[3], (E,), jnp.float32),
        "w1": 0.05 * jax.random.normal(ks[4], (F, E), jnp.float32),
        "b1": 0.02 * jax.random.normal(ks[5], (F,), jnp.float32),
        "w2": 0.05 * jax.random.normal(ks[6], (E, F), jnp.float32),
        "b2": 0.02 * jax.random.normal(ks[7], (E,), jnp.float32),
        "g1": 1.0 + 0.1 * jax.random.normal(ks[8], (E,), jnp.float32),
        "be1": 0.05 * jax.random.normal(ks[9], (E,), jnp.float32),
        "g2": 1.0 + 0.1 * jax.random.normal(ks[10], (E,), jnp.float32),
        "be2": 0.05 * jax.random.normal(ks[11], (E,), jnp.float32),
    }

    tgt = jax.random.normal(ks[12], (T, N, E), jnp.float32)
    memory = jax.random.normal(ks[13], (S, N, E), jnp.float32)

    out = decoder_layer(tgt, memory, params)
    out = jax.block_until_ready(out)

    ref = decoder_layer_ref(tgt, memory, params)
    assert out.shape == (T, N, E)
    assert jnp.allclose(out, ref, atol=1e-4, rtol=1e-4), \
        f"max abs err {float(jnp.max(jnp.abs(out - ref)))}"

    print("KERNEL_OK")
</pallas_src>

<mosaic_0001>
module attributes {stable_mosaic.version = 11 : i64} {
  func.func @decoder_layer_kernel(%arg0: i32, %arg1: memref<2x8x32xf32, #tpu.memory_space<vmem>>, %arg2: memref<2x16x32xf32, #tpu.memory_space<vmem>>, %arg3: memref<32x32xf32, #tpu.memory_space<vmem>>, %arg4: memref<1x32xf32, #tpu.memory_space<vmem>>, %arg5: memref<32x64xf32, #tpu.memory_space<vmem>>, %arg6: memref<1x64xf32, #tpu.memory_space<vmem>>, %arg7: memref<4x8x32xf32, #tpu.memory_space<vmem>>, %arg8: memref<1x32xf32, #tpu.memory_space<vmem>>, %arg9: memref<32x64xf32, #tpu.memory_space<vmem>>, %arg10: memref<1x64xf32, #tpu.memory_space<vmem>>, %arg11: memref<64x32xf32, #tpu.memory_space<vmem>>, %arg12: memref<1x32xf32, #tpu.memory_space<vmem>>, %arg13: memref<1x32xf32, #tpu.memory_space<vmem>>, %arg14: memref<1x32xf32, #tpu.memory_space<vmem>>, %arg15: memref<1x32xf32, #tpu.memory_space<vmem>>, %arg16: memref<1x32xf32, #tpu.memory_space<vmem>>, %arg17: memref<2x8x32xf32, #tpu.memory_space<vmem>>) attributes {dimension_semantics = [#tpu.dimension_semantics<parallel>], iteration_bounds = array<i64: 1>, scalar_prefetch = 0 : i64, scratch_operands = 0 : i64, tpu.core_type = #tpu.core_type<tc>, window_params = [{pipeline_mode = #tpu.pipeline_mode<synchronous>, transform_indices = @transform_0, window_bounds = array<i64: 2, 8, 32>}, {pipeline_mode = #tpu.pipeline_mode<synchronous>, transform_indices = @transform_1, window_bounds = array<i64: 2, 16, 32>}, {pipeline_mode = #tpu.pipeline_mode<synchronous>, transform_indices = @transform_2, window_bounds = array<i64: 32, 32>}, {pipeline_mode = #tpu.pipeline_mode<synchronous>, transform_indices = @transform_3, window_bounds = array<i64: 1, 32>}, {pipeline_mode = #tpu.pipeline_mode<synchronous>, transform_indices = @transform_4, window_bounds = array<i64: 32, 64>}, {pipeline_mode = #tpu.pipeline_mode<synchronous>, transform_indices = @transform_5, window_bounds = array<i64: 1, 64>}, {pipeline_mode = #tpu.pipeline_mode<synchronous>, transform_indices = @transform_6, window_bounds = array<i64: 4, 8, 32>}, {pipeline_mode = #tpu.pipeline_mode<synchronous>, transform_indices = @transform_7, window_bounds = array<i64: 1, 32>}, {pipeline_mode = #tpu.pipeline_mode<synchronous>, transform_indices = @transform_8, window_bounds = array<i64: 32, 64>}, {pipeline_mode = #tpu.pipeline_mode<synchronous>, transform_indices = @transform_9, window_bounds = array<i64: 1, 64>}, {pipeline_mode = #tpu.pipeline_mode<synchronous>, transform_indices = @transform_10, window_bounds = array<i64: 64, 32>}, {pipeline_mode = #tpu.pipeline_mode<synchronous>, transform_indices = @transform_11, window_bounds = array<i64: 1, 32>}, {pipeline_mode = #tpu.pipeline_mode<synchronous>, transform_indices = @transform_12, window_bounds = array<i64: 1, 32>}, {pipeline_mode = #tpu.pipeline_mode<synchronous>, transform_indices = @transform_13, window_bounds = array<i64: 1, 32>}, {pipeline_mode = #tpu.pipeline_mode<synchronous>, transform_indices = @transform_14, window_bounds = array<i64: 1, 32>}, {pipeline_mode = #tpu.pipeline_mode<synchronous>, transform_indices = @transform_15, window_bounds = array<i64: 1, 32>}, {pipeline_mode = #tpu.pipeline_mode<synchronous>, transform_indices = @transform_16, window_bounds = array<i64: 2, 8, 32>}]} {
    %c0 = arith.constant 0 : index
    %c0_0 = arith.constant 0 : index
    %c0_1 = arith.constant 0 : index
    %0 = vector.load %arg1[%c0, %c0_0, %c0_1] : memref<2x8x32xf32, #tpu.memory_space<vmem>>, vector<2x8x32xf32>
    %1 = vector.shape_cast %0 : vector<2x8x32xf32> to vector<16x32xf32>
    %c0_2 = arith.constant 0 : index
    %c0_3 = arith.constant 0 : index
    %c0_4 = arith.constant 0 : index
    %2 = vector.load %arg2[%c0_2, %c0_3, %c0_4] : memref<2x16x32xf32, #tpu.memory_space<vmem>>, vector<2x16x32xf32>
    %3 = vector.shape_cast %2 : vector<2x16x32xf32> to vector<32x32xf32>
    %c0_5 = arith.constant 0 : index
    %c0_6 = arith.constant 0 : index
    %4 = vector.load %arg3[%c0_5, %c0_6] : memref<32x32xf32, #tpu.memory_space<vmem>>, vector<32x32xf32>
    %cst = arith.constant dense<0.000000e+00> : vector<16x32xf32>
    %5 = tpu.matmul %1, %4, %cst {dimension_numbers = #tpu.dot_dimension_numbers<[1], [0], [0], [1], [0, 0, 1, 1], [], []>} : vector<16x32xf32>, vector<32x32xf32>, vector<16x32xf32> -> vector<16x32xf32>
    %c0_7 = arith.constant 0 : index
    %c0_8 = arith.constant 0 : index
    %6 = vector.load %arg4[%c0_7, %c0_8] : memref<1x32xf32, #tpu.memory_space<vmem>>, vector<1x32xf32>
    %7 = vector.broadcast %6 : vector<1x32xf32> to vector<16x32xf32>
    %8 = arith.addf %5, %7 : vector<16x32xf32>
    %c0_9 = arith.constant 0 : index
    %c0_10 = arith.constant 0 : index
    %9 = vector.load %arg5[%c0_9, %c0_10] : memref<32x64xf32, #tpu.memory_space<vmem>>, vector<32x64xf32>
    %cst_11 = arith.constant dense<0.000000e+00> : vector<32x64xf32>
    %10 = tpu.matmul %3, %9, %cst_11 {dimension_numbers = #tpu.dot_dimension_numbers<[1], [0], [0], [1], [0, 0, 1, 1], [], []>} : vector<32x32xf32>, vector<32x64xf32>, vector<32x64xf32> -> vector<32x64xf32>
    %c0_12 = arith.constant 0 : index
    %c0_13 = arith.constant 0 : index
    %11 = vector.load %arg6[%c0_12, %c0_13] : memref<1x64xf32, #tpu.memory_space<vmem>>, vector<1x64xf32>
    %12 = vector.broadcast %11 : vector<1x64xf32> to vector<32x64xf32>
    %13 = arith.addf %10, %12 : vector<32x64xf32>
    %14 = vector.extract_strided_slice %8 {offsets = [0, 0], sizes = [16, 8], strides = [1, 1]} : vector<16x32xf32> to vector<16x8xf32>
    %15 = vector.extract_strided_slice %8 {offsets = [0, 8], sizes = [16, 8], strides = [1, 1]} : vector<16x32xf32> to vector<16x8xf32>
    %16 = vector.extract_strided_slice %8 {offsets = [0, 16], sizes = [16, 8], strides = [1, 1]} : vector<16x32xf32> to vector<16x8xf32>
    %17 = vector.extract_strided_slice %8 {offsets = [0, 24], sizes = [16, 8], strides = [1, 1]} : vector<16x32xf32> to vector<16x8xf32>
    %18 = vector.shape_cast %14 : vector<16x8xf32> to vector<1x16x8xf32>
    %19 = vector.shape_cast %15 : vector<16x8xf32> to vector<1x16x8xf32>
    %20 = vector.shape_cast %16 : vector<16x8xf32> to vector<1x16x8xf32>
    %21 = vector.shape_cast %17 : vector<16x8xf32> to vector<1x16x8xf32>
    %22 = tpu.concatenate %18, %19, %20, %21 in 0 : vector<1x16x8xf32>, vector<1x16x8xf32>, vector<1x16x8xf32>, vector<1x16x8xf32> -> vector<4x16x8xf32>
    %23 = vector.shape_cast %22 : vector<4x16x8xf32> to vector<8x8x8xf32>
    %24 = vector.extract_strided_slice %13 {offsets = [0, 0], sizes = [32, 8], strides = [1, 1]} : vector<32x64xf32> to vector<32x8xf32>
    %25 = vector.extract_strided_slice %13 {offsets = [0, 8], sizes = [32, 8], strides = [1, 1]} : vector<32x64xf32> to vector<32x8xf32>
    %26 = vector.extract_strided_slice %13 {offsets = [0, 16], sizes = [32, 8], strides = [1, 1]} : vector<32x64xf32> to vector<32x8xf32>
    %27 = vector.extract_strided_slice %13 {offsets = [0, 24], sizes = [32, 8], strides = [1, 1]} : vector<32x64xf32> to vector<32x8xf32>
    %28 = vector.shape_cast %24 : vector<32x8xf32> to vector<1x32x8xf32>
    %29 = vector.shape_cast %25 : vector<32x8xf32> to vector<1x32x8xf32>
    %30 = vector.shape_cast %26 : vector<32x8xf32> to vector<1x32x8xf32>
    %31 = vector.shape_cast %27 : vector<32x8xf32> to vector<1x32x8xf32>
    %32 = tpu.concatenate %28, %29, %30, %31 in 0 : vector<1x32x8xf32>, vector<1x32x8xf32>, vector<1x32x8xf32>, vector<1x32x8xf32> -> vector<4x32x8xf32>
    %33 = vector.shape_cast %32 : vector<4x32x8xf32> to vector<8x16x8xf32>
    %34 = vector.extract_strided_slice %13 {offsets = [0, 32], sizes = [32, 8], strides = [1, 1]} : vector<32x64xf32> to vector<32x8xf32>
    %35 = vector.extract_strided_slice %13 {offsets = [0, 40], sizes = [32, 8], strides = [1, 1]} : vector<32x64xf32> to vector<32x8xf32>
    %36 = vector.extract_strided_slice %13 {offsets = [0, 48], sizes = [32, 8], strides = [1, 1]} : vector<32x64xf32> to vector<32x8xf32>
    %37 = vector.extract_strided_slice %13 {offsets = [0, 56], sizes = [32, 8], strides = [1, 1]} : vector<32x64xf32> to vector<32x8xf32>
    %38 = vector.shape_cast %34 : vector<32x8xf32> to vector<1x32x8xf32>
    %39 = vector.shape_cast %35 : vector<32x8xf32> to vector<1x32x8xf32>
    %40 = vector.shape_cast %36 : vector<32x8xf32> to vector<1x32x8xf32>
    %41 = vector.shape_cast %37 : vector<32x8xf32> to vector<1x32x8xf32>
    %42 = tpu.concatenate %38, %39, %40, %41 in 0 : vector<1x32x8xf32>, vector<1x32x8xf32>, vector<1x32x8xf32>, vector<1x32x8xf32> -> vector<4x32x8xf32>
    %43 = vector.shape_cast %42 : vector<4x32x8xf32> to vector<8x16x8xf32>
    "tpu.trace_start"() <{level = 10 : i32, message = "btd,bmd->btm"}> : () -> ()
    %cst_14 = arith.constant dense<0.000000e+00> : vector<8x8x16xf32>
    %44 = tpu.matmul %23, %33, %cst_14 {dimension_numbers = #tpu.dot_dimension_numbers<[2], [2], [1], [1], [0, 0, 0, 1, 1, 1], [0], [0]>} : vector<8x8x8xf32>, vector<8x16x8xf32>, vector<8x8x16xf32> -> vector<8x8x16xf32>
    "tpu.trace_stop"() : () -> ()
    %cst_15 = arith.constant dense<0xFF800000> : vector<8x8xf32>
    %45 = vector.multi_reduction <maximumf>, %44, %cst_15 [2] : vector<8x8x16xf32> to vector<8x8xf32>
    %46 = vector.shape_cast %45 : vector<8x8xf32> to vector<8x8x1xf32>
    %47 = vector.broadcast %46 : vector<8x8x1xf32> to vector<8x8x16xf32>
    %48 = arith.subf %44, %47 : vector<8x8x16xf32>
    %49 = math.exp %48 : vector<8x8x16xf32>
    %cst_16 = arith.constant dense<0.000000e+00> : vector<8x8xf32>
    %50 = vector.multi_reduction <add>, %49, %cst_16 [2] : vector<8x8x16xf32> to vector<8x8xf32>
    %51 = vector.shape_cast %50 : vector<8x8xf32> to vector<8x8x1xf32>
    %52 = tpu.reciprocal %51 : vector<8x8x1xf32> -> vector<8x8x1xf32>
    %53 = vector.broadcast %52 : vector<8x8x1xf32> to vector<8x8x16xf32>
    %54 = arith.mulf %49, %53 : vector<8x8x16xf32>
    "tpu.trace_start"() <{level = 10 : i32, message = "btm,bmd->btd"}> : () -> ()
    %cst_17 = arith.constant dense<0.000000e+00> : vector<8x8x8xf32>
    %55 = tpu.matmul %54, %43, %cst_17 {dimension_numbers = #tpu.dot_dimension_numbers<[2], [1], [1], [2], [0, 0, 0, 1, 1, 2], [0], [0]>} : vector<8x8x16xf32>, vector<8x16x8xf32>, vector<8x8x8xf32> -> vector<8x8x8xf32>
    "tpu.trace_stop"() : () -> ()
    %56 = vector.shape_cast %55 : vector<8x8x8xf32> to vector<4x16x8xf32>
    %c0_18 = arith.constant 0 : index
    %c0_19 = arith.constant 0 : index
    %c0_20 = arith.constant 0 : index
    %57 = vector.load %arg7[%c0_18, %c0_19, %c0_20] : memref<4x8x32xf32, #tpu.memory_space<vmem>>, vector<4x8x32xf32>
    "tpu.trace_start"() <{level = 10 : i32, message = "hrd,hde->hre"}> : () -> ()
    %cst_21 = arith.constant dense<0.000000e+00> : vector<4x16x32xf32>
    %58 = tpu.matmul %56, %57, %cst_21 {dimension_numbers = #tpu.dot_dimension_numbers<[2], [1], [1], [2], [0, 0, 0, 1, 1, 2], [0], [0]>} : vector<4x16x8xf32>, vector<4x8x32xf32>, vector<4x16x32xf32> -> vector<4x16x32xf32>
    "tpu.trace_stop"() : () -> ()
    %59 = vector.extract_strided_slice %58 {offsets = [0, 0, 0], sizes = [1, 16, 32], strides = [1, 1, 1]} : vector<4x16x32xf32> to vector<1x16x32xf32>
    %60 = vector.shape_cast %59 : vector<1x16x32xf32> to vector<16x32xf32>
    %61 = vector.extract_strided_slice %58 {offsets = [1, 0, 0], sizes = [1, 16, 32], strides = [1, 1, 1]} : vector<4x16x32xf32> to vector<1x16x32xf32>
    %62 = vector.shape_cast %61 : vector<1x16x32xf32> to vector<16x32xf32>
    %63 = arith.addf %60, %62 : vector<16x32xf32>
    %64 = vector.extract_strided_slice %58 {offsets = [2, 0, 0], sizes = [1, 16, 32], strides = [1, 1, 1]} : vector<4x16x32xf32> to vector<1x16x32xf32>
    %65 = vector.shape_cast %64 : vector<1x16x32xf32> to vector<16x32xf32>
    %66 = arith.addf %63, %65 : vector<16x32xf32>
    %67 = vector.extract_strided_slice %58 {offsets = [3, 0, 0], sizes = [1, 16, 32], strides = [1, 1, 1]} : vector<4x16x32xf32> to vector<1x16x32xf32>
    %68 = vector.shape_cast %67 : vector<1x16x32xf32> to vector<16x32xf32>
    %69 = arith.addf %66, %68 : vector<16x32xf32>
    %c0_22 = arith.constant 0 : index
    %c0_23 = arith.constant 0 : index
    %70 = vector.load %arg8[%c0_22, %c0_23] : memref<1x32xf32, #tpu.memory_space<vmem>>, vector<1x32xf32>
    %71 = vector.broadcast %70 : vector<1x32xf32> to vector<16x32xf32>
    %72 = arith.addf %69, %71 : vector<16x32xf32>
    %73 = arith.addf %1, %72 : vector<16x32xf32>
    %c0_24 = arith.constant 0 : index
    %c0_25 = arith.constant 0 : index
    %74 = vector.load %arg13[%c0_24, %c0_25] : memref<1x32xf32, #tpu.memory_space<vmem>>, vector<1x32xf32>
    %c0_26 = arith.constant 0 : index
    %c0_27 = arith.constant 0 : index
    %75 = vector.load %arg14[%c0_26, %c0_27] : memref<1x32xf32, #tpu.memory_space<vmem>>, vector<1x32xf32>
    %cst_28 = arith.constant dense<0.000000e+00> : vector<16xf32>
    %76 = vector.multi_reduction <add>, %73, %cst_28 [1] : vector<16x32xf32> to vector<16xf32>
    %77 = vector.shape_cast %76 : vector<16xf32> to vector<16x1xf32>
    %cst_29 = arith.constant 3.200000e+01 : f32
    %78 = vector.broadcast %cst_29 : f32 to vector<16x1xf32>
    %79 = arith.divf %77, %78 : vector<16x1xf32>
    %80 = vector.broadcast %79 : vector<16x1xf32> to vector<16x32xf32>
    %81 = arith.subf %73, %80 : vector<16x32xf32>
    %82 = arith.mulf %81, %81 : vector<16x32xf32>
    %cst_30 = arith.constant dense<0.000000e+00> : vector<16xf32>
    %83 = vector.multi_reduction <add>, %82, %cst_30 [1] : vector<16x32xf32> to vector<16xf32>
    %84 = vector.shape_cast %83 : vector<16xf32> to vector<16x1xf32>
    %cst_31 = arith.constant 3.200000e+01 : f32
    %85 = vector.broadcast %cst_31 : f32 to vector<16x1xf32>
    %86 = arith.divf %84, %85 : vector<16x1xf32>
    %87 = vector.broadcast %79 : vector<16x1xf32> to vector<16x32xf32>
    %88 = arith.subf %73, %87 : vector<16x32xf32>
    %cst_32 = arith.constant 9.99999974E-6 : f32
    %89 = vector.broadcast %cst_32 : f32 to vector<16x1xf32>
    %90 = arith.addf %86, %89 : vector<16x1xf32>
    %91 = math.rsqrt %90 : vector<16x1xf32>
    %92 = vector.broadcast %91 : vector<16x1xf32> to vector<16x32xf32>
    %93 = arith.mulf %88, %92 : vector<16x32xf32>
    %94 = vector.broadcast %74 : vector<1x32xf32> to vector<16x32xf32>
    %95 = arith.mulf %93, %94 : vector<16x32xf32>
    %96 = vector.broadcast %75 : vector<1x32xf32> to vector<16x32xf32>
    %97 = arith.addf %95, %96 : vector<16x32xf32>
    %c0_33 = arith.constant 0 : index
    %c0_34 = arith.constant 0 : index
    %98 = vector.load %arg9[%c0_33, %c0_34] : memref<32x64xf32, #tpu.memory_space<vmem>>, vector<32x64xf32>
    %cst_35 = arith.constant dense<0.000000e+00> : vector<16x64xf32>
    %99 = tpu.matmul %97, %98, %cst_35 {dimension_numbers = #tpu.dot_dimension_numbers<[1], [0], [0], [1], [0, 0, 1, 1], [], []>} : vector<16x32xf32>, vector<32x64xf32>, vector<16x64xf32> -> vector<16x64xf32>
    %c0_36 = arith.constant 0 : index
    %c0_37 = arith.constant 0 : index
    %100 = vector.load %arg10[%c0_36, %c0_37] : memref<1x64xf32, #tpu.memory_space<vmem>>, vector<1x64xf32>
    %101 = vector.broadcast %100 : vector<1x64xf32> to vector<16x64xf32>
    %102 = arith.addf %99, %101 : vector<16x64xf32>
    %cst_38 = arith.constant 0.000000e+00 : f32
    %103 = vector.broadcast %cst_38 : f32 to vector<16x64xf32>
    %104 = arith.maximumf %102, %103 : vector<16x64xf32>
    %c0_39 = arith.constant 0 : index
    %c0_40 = arith.constant 0 : index
    %105 = vector.load %arg11[%c0_39, %c0_40] : memref<64x32xf32, #tpu.memory_space<vmem>>, vector<64x32xf32>
    %cst_41 = arith.constant dense<0.000000e+00> : vector<16x32xf32>
    %106 = tpu.matmul %104, %105, %cst_41 {dimension_numbers = #tpu.dot_dimension_numbers<[1], [0], [0], [1], [0, 0, 1, 1], [], []>} : vector<16x64xf32>, vector<64x32xf32>, vector<16x32xf32> -> vector<16x32xf32>
    %c0_42 = arith.constant 0 : index
    %c0_43 = arith.constant 0 : index
    %107 = vector.load %arg12[%c0_42, %c0_43] : memref<1x32xf32, #tpu.memory_space<vmem>>, vector<1x32xf32>
    %108 = vector.broadcast %107 : vector<1x32xf32> to vector<16x32xf32>
    %109 = arith.addf %106, %108 : vector<16x32xf32>
    %110 = arith.addf %97, %109 : vector<16x32xf32>
    %c0_44 = arith.constant 0 : index
    %c0_45 = arith.constant 0 : index
    %111 = vector.load %arg15[%c0_44, %c0_45] : memref<1x32xf32, #tpu.memory_space<vmem>>, vector<1x32xf32>
    %c0_46 = arith.constant 0 : index
    %c0_47 = arith.constant 0 : index
    %112 = vector.load %arg16[%c0_46, %c0_47] : memref<1x32xf32, #tpu.memory_space<vmem>>, vector<1x32xf32>
    %cst_48 = arith.constant dense<0.000000e+00> : vector<16xf32>
    %113 = vector.multi_reduction <add>, %110, %cst_48 [1] : vector<16x32xf32> to vector<16xf32>
    %114 = vector.shape_cast %113 : vector<16xf32> to vector<16x1xf32>
    %cst_49 = arith.constant 3.200000e+01 : f32
    %115 = vector.broadcast %cst_49 : f32 to vector<16x1xf32>
    %116 = arith.divf %114, %115 : vector<16x1xf32>
    %117 = vector.broadcast %116 : vector<16x1xf32> to vector<16x32xf32>
    %118 = arith.subf %110, %117 : vector<16x32xf32>
    %119 = arith.mulf %118, %118 : vector<16x32xf32>
    %cst_50 = arith.constant dense<0.000000e+00> : vector<16xf32>
    %120 = vector.multi_reduction <add>, %119, %cst_50 [1] : vector<16x32xf32> to vector<16xf32>
    %121 = vector.shape_cast %120 : vector<16xf32> to vector<16x1xf32>
    %cst_51 = arith.constant 3.200000e+01 : f32
    %122 = vector.broadcast %cst_51 : f32 to vector<16x1xf32>
    %123 = arith.divf %121, %122 : vector<16x1xf32>
    %124 = vector.broadcast %116 : vector<16x1xf32> to vector<16x32xf32>
    %125 = arith.subf %110, %124 : vector<16x32xf32>
    %cst_52 = arith.constant 9.99999974E-6 : f32
    %126 = vector.broadcast %cst_52 : f32 to vector<16x1xf32>
    %127 = arith.addf %123, %126 : vector<16x1xf32>
    %128 = math.rsqrt %127 : vector<16x1xf32>
    %129 = vector.broadcast %128 : vector<16x1xf32> to vector<16x32xf32>
    %130 = arith.mulf %125, %129 : vector<16x32xf32>
    %131 = vector.broadcast %111 : vector<1x32xf32> to vector<16x32xf32>
    %132 = arith.mulf %130, %131 : vector<16x32xf32>
    %133 = vector.broadcast %112 : vector<1x32xf32> to vector<16x32xf32>
    %134 = arith.addf %132, %133 : vector<16x32xf32>
    %135 = vector.shape_cast %134 : vector<16x32xf32> to vector<2x8x32xf32>
    %c0_53 = arith.constant 0 : index
    %c0_54 = arith.constant 0 : index
    %c0_55 = arith.constant 0 : index
    %136 = vector.load %arg17[%c0_53, %c0_54, %c0_55] : memref<2x8x32xf32, #tpu.memory_space<vmem>>, vector<2x8x32xf32>
    tpu.vector_store %arg17[%c0_53, %c0_54, %c0_55], %135 {strides = array<i32>} : memref<2x8x32xf32, #tpu.memory_space<vmem>>, vector<2x8x32xf32>,
    return
  }
  func.func @transform_0(%arg0: i32) -> (i32, i32, i32) {
    %c0_i32 = arith.constant 0 : i32
    %c0_i32_0 = arith.constant 0 : i32
    %c0_i32_1 = arith.constant 0 : i32
    %c0_i32_2 = arith.constant 0 : i32
    return %c0_i32, %c0_i32_0, %c0_i32_1 : i32, i32, i32
  }
  func.func @transform_1(%arg0: i32) -> (i32, i32, i32) {
    %c0_i32 = arith.constant 0 : i32
    %c0_i32_0 = arith.constant 0 : i32
    %c0_i32_1 = arith.constant 0 : i32
    %c0_i32_2 = arith.constant 0 : i32
    return %c0_i32, %c0_i32_0, %c0_i32_1 : i32, i32, i32
  }
  func.func @transform_2(%arg0: i32) -> (i32, i32) {
    %c0_i32 = arith.constant 0 : i32
    %c0_i32_0 = arith.constant 0 : i32
    %c0_i32_1 = arith.constant 0 : i32
    return %c0_i32, %c0_i32_0 : i32, i32
  }
  func.func @transform_3(%arg0: i32) -> (i32, i32) {
    %c0_i32 = arith.constant 0 : i32
    %c0_i32_0 = arith.constant 0 : i32
    %c0_i32_1 = arith.constant 0 : i32
    return %c0_i32, %c0_i32_0 : i32, i32
  }
  func.func @transform_4(%arg0: i32) -> (i32, i32) {
    %c0_i32 = arith.constant 0 : i32
    %c0_i32_0 = arith.constant 0 : i32
    %c0_i32_1 = arith.constant 0 : i32
    return %c0_i32, %c0_i32_0 : i32, i32
  }
  func.func @transform_5(%arg0: i32) -> (i32, i32) {
    %c0_i32 = arith.constant 0 : i32
    %c0_i32_0 = arith.constant 0 : i32
    %c0_i32_1 = arith.constant 0 : i32
    return %c0_i32, %c0_i32_0 : i32, i32
  }
  func.func @transform_6(%arg0: i32) -> (i32, i32, i32) {
    %c0_i32 = arith.constant 0 : i32
    %c0_i32_0 = arith.constant 0 : i32
    %c0_i32_1 = arith.constant 0 : i32
    %c0_i32_2 = arith.constant 0 : i32
    return %c0_i32, %c0_i32_0, %c0_i32_1 : i32, i32, i32
  }
  func.func @transform_7(%arg0: i32) -> (i32, i32) {
    %c0_i32 = arith.constant 0 : i32
    %c0_i32_0 = arith.constant 0 : i32
    %c0_i32_1 = arith.constant 0 : i32
    return %c0_i32, %c0_i32_0 : i32, i32
  }
  func.func @transform_8(%arg0: i32) -> (i32, i32) {
    %c0_i32 = arith.constant 0 : i32
    %c0_i32_0 = arith.constant 0 : i32
    %c0_i32_1 = arith.constant 0 : i32
    return %c0_i32, %c0_i32_0 : i32, i32
  }
  func.func @transform_9(%arg0: i32) -> (i32, i32) {
    %c0_i32 = arith.constant 0 : i32
    %c0_i32_0 = arith.constant 0 : i32
    %c0_i32_1 = arith.constant 0 : i32
    return %c0_i32, %c0_i32_0 : i32, i32
  }
  func.func @transform_10(%arg0: i32) -> (i32, i32) {
    %c0_i32 = arith.constant 0 : i32
    %c0_i32_0 = arith.constant 0 : i32
    %c0_i32_1 = arith.constant 0 : i32
    return %c0_i32, %c0_i32_0 : i32, i32
  }
  func.func @transform_11(%arg0: i32) -> (i32, i32) {
    %c0_i32 = arith.constant 0 : i32
    %c0_i32_0 = arith.constant 0 : i32
    %c0_i32_1 = arith.constant 0 : i32
    return %c0_i32, %c0_i32_0 : i32, i32
  }
  func.func @transform_12(%arg0: i32) -> (i32, i32) {
    %c0_i32 = arith.constant 0 : i32
    %c0_i32_0 = arith.constant 0 : i32
    %c0_i32_1 = arith.constant 0 : i32
    return %c0_i32, %c0_i32_0 : i32, i32
  }
  func.func @transform_13(%arg0: i32) -> (i32, i32) {
    %c0_i32 = arith.constant 0 : i32
    %c0_i32_0 = arith.constant 0 : i32
    %c0_i32_1 = arith.constant 0 : i32
    return %c0_i32, %c0_i32_0 : i32, i32
  }
  func.func @transform_14(%arg0: i32) -> (i32, i32) {
    %c0_i32 = arith.constant 0 : i32
    %c0_i32_0 = arith.constant 0 : i32
    %c0_i32_1 = arith.constant 0 : i32
    return %c0_i32, %c0_i32_0 : i32, i32
  }
  func.func @transform_15(%arg0: i32) -> (i32, i32) {
    %c0_i32 = arith.constant 0 : i32
    %c0_i32_0 = arith.constant 0 : i32
    %c0_i32_1 = arith.constant 0 : i32
    return %c0_i32, %c0_i32_0 : i32, i32
  }
  func.func @transform_16(%arg0: i32) -> (i32, i32, i32) {
    %c0_i32 = arith.constant 0 : i32
    %c0_i32_0 = arith.constant 0 : i32
    %c0_i32_1 = arith.constant 0 : i32
    %c0_i32_2 = arith.constant 0 : i32
    return %c0_i32, %c0_i32_0, %c0_i32_1 : i32, i32, i32
  }
}

</mosaic_0001>

<llo_original>
// kernel: _decoder_layer_impl.1
$region0: #{_decoder_layer_impl.1}
  #allocation0 [shape = 'u32[]', space=smem, size = 0x4, offset = 0x4, fixed_abs, tag = 'smem constant byte address 0x4 - core index']
  #allocation1 [shape = 'u32[144,128]{1,0:T(1,128)}', space=vmem, size = 0x12000, scoped, tag = 'internal scratch']
  %s0 = inlined_call_operand.vmem [shape: f32[2,8,32], index: 0, kind: input, shape index: {}]
  %s1 = inlined_call_operand.vmem [shape: f32[2,16,32], index: 1, kind: input, shape index: {}]
  %s2 = inlined_call_operand.vmem [shape: f32[32,32], index: 2, kind: input, shape index: {}]
  %s3 = inlined_call_operand.vmem [shape: f32[1,32], index: 3, kind: input, shape index: {}]
  %s4 = inlined_call_operand.vmem [shape: f32[32,64], index: 4, kind: input, shape index: {}]
  %s5 = inlined_call_operand.vmem [shape: f32[1,64], index: 5, kind: input, shape index: {}]
  %s6 = inlined_call_operand.vmem [shape: f32[4,8,32], index: 6, kind: input, shape index: {}]
  %s7 = inlined_call_operand.vmem [shape: f32[1,32], index: 7, kind: input, shape index: {}]
  %s8 = inlined_call_operand.vmem [shape: f32[32,64], index: 8, kind: input, shape index: {}]
  %s9 = inlined_call_operand.vmem [shape: f32[1,64], index: 9, kind: input, shape index: {}]
  %s10 = inlined_call_operand.vmem [shape: f32[64,32], index: 10, kind: input, shape index: {}]
  %s11 = inlined_call_operand.vmem [shape: f32[1,32], index: 11, kind: input, shape index: {}]
  %s12 = inlined_call_operand.vmem [shape: f32[1,32], index: 12, kind: input, shape index: {}]
  %s13 = inlined_call_operand.vmem [shape: f32[1,32], index: 13, kind: input, shape index: {}]
  %s14 = inlined_call_operand.vmem [shape: f32[1,32], index: 14, kind: input, shape index: {}]
  %s15 = inlined_call_operand.vmem [shape: f32[1,32], index: 15, kind: input, shape index: {}]
  %s16 = inlined_call_operand.vmem [shape: f32[2,8,32], index: 16, kind: output, shape index: {}]
  %s17 = sld [smem:[#allocation0]]
  $region74: #{_decoder_layer_impl.1} parent=0
    _
  %s19 = ssub.s32 1, %s17
  %s20 = scalar_select 0, %s19, %s17
  // Predicated region
  $region2: #{_decoder_layer_impl.1} parent=0 // pred_check
    _
  $region3: #{_decoder_layer_impl.1} parent=0 // pred_check_branch
    %22 = sbr.rel (0) target = $region5
  $region4: #{_decoder_layer_impl.1} parent=0 // pred_region
    _
  $region5: #{_decoder_layer_impl.1} parent=0 // pred_fallthru
    _
  // Predicated region
  $region6: #{_decoder_layer_impl.1} parent=0 // pred_check
    _
  $region7: #{_decoder_layer_impl.1} parent=0 // pred_check_branch
    %24 = sbr.rel (0) target = $region9
  $region8: #{_decoder_layer_impl.1} parent=0 // pred_region
    _
  $region9: #{_decoder_layer_impl.1} parent=0 // pred_fallthru
    _
  // Predicated region
  $region10: #{_decoder_layer_impl.1} parent=0 // pred_check
    _
  $region11: #{_decoder_layer_impl.1} parent=0 // pred_check_branch
    %26 = sbr.rel (0) target = $region13
  $region12: #{_decoder_layer_impl.1} parent=0 // pred_region
    _
  $region13: #{_decoder_layer_impl.1} parent=0 // pred_fallthru
    _
  // Predicated region
  $region14: #{_decoder_layer_impl.1} parent=0 // pred_check
    _
  $region15: #{_decoder_layer_impl.1} parent=0 // pred_check_branch
    %28 = sbr.rel (0) target = $region17
  $region16: #{_decoder_layer_impl.1} parent=0 // pred_region
    _
  $region17: #{_decoder_layer_impl.1} parent=0 // pred_fallthru
    _
  // Predicated region
  $region18: #{_decoder_layer_impl.1} parent=0 // pred_check
    _
  $region19: #{_decoder_layer_impl.1} parent=0 // pred_check_branch
    %30 = sbr.rel (0) target = $region21
  $region20: #{_decoder_layer_impl.1} parent=0 // pred_region
    _
  $region21: #{_decoder_layer_impl.1} parent=0 // pred_fallthru
    _
  // Predicated region
  $region22: #{_decoder_layer_impl.1} parent=0 // pred_check
    _
  $region23: #{_decoder_layer_impl.1} parent=0 // pred_check_branch
    %32 = sbr.rel (0) target = $region25
  $region24: #{_decoder_layer_impl.1} parent=0 // pred_region
    _
  $region25: #{_decoder_layer_impl.1} parent=0 // pred_fallthru
    _
  // Predicated region
  $region26: #{_decoder_layer_impl.1} parent=0 // pred_check
    _
  $region27: #{_decoder_layer_impl.1} parent=0 // pred_check_branch
    %34 = sbr.rel (0) target = $region29
  $region28: #{_decoder_layer_impl.1} parent=0 // pred_region
    _
  $region29: #{_decoder_layer_impl.1} parent=0 // pred_fallthru
    _
  // Predicated region
  $region30: #{_decoder_layer_impl.1} parent=0 // pred_check
    _
  $region31: #{_decoder_layer_impl.1} parent=0 // pred_check_branch
    %36 = sbr.rel (0) target = $region33
  $region32: #{_decoder_layer_impl.1} parent=0 // pred_region
    _
  $region33: #{_decoder_layer_impl.1} parent=0 // pred_fallthru
    _
  // Predicated region
  $region34: #{_decoder_layer_impl.1} parent=0 // pred_check
    _
  $region35: #{_decoder_layer_impl.1} parent=0 // pred_check_branch
    %38 = sbr.rel (0) target = $region37
  $region36: #{_decoder_layer_impl.1} parent=0 // pred_region
    _
  $region37: #{_decoder_layer_impl.1} parent=0 // pred_fallthru
    _
  // Predicated region
  $region38: #{_decoder_layer_impl.1} parent=0 // pred_check
    _
  $region39: #{_decoder_layer_impl.1} parent=0 // pred_check_branch
    %40 = sbr.rel (0) target = $region41
  $region40: #{_decoder_layer_impl.1} parent=0 // pred_region
    _
  $region41: #{_decoder_layer_impl.1} parent=0 // pred_fallthru
    _
  // Predicated region
  $region42: #{_decoder_layer_impl.1} parent=0 // pred_check
    _
  $region43: #{_decoder_layer_impl.1} parent=0 // pred_check_branch
    %42 = sbr.rel (0) target = $region45
  $region44: #{_decoder_layer_impl.1} parent=0 // pred_region
    _
  $region45: #{_decoder_layer_impl.1} parent=0 // pred_fallthru
    _
  // Predicated region
  $region46: #{_decoder_layer_impl.1} parent=0 // pred_check
    _
  $region47: #{_decoder_layer_impl.1} parent=0 // pred_check_branch
    %44 = sbr.rel (0) target = $region49
  $region48: #{_decoder_layer_impl.1} parent=0 // pred_region
    _
  $region49: #{_decoder_layer_impl.1} parent=0 // pred_fallthru
    _
  // Predicated region
  $region50: #{_decoder_layer_impl.1} parent=0 // pred_check
    _
  $region51: #{_decoder_layer_impl.1} parent=0 // pred_check_branch
    %46 = sbr.rel (0) target = $region53
  $region52: #{_decoder_layer_impl.1} parent=0 // pred_region
    _
  $region53: #{_decoder_layer_impl.1} parent=0 // pred_fallthru
    _
  // Predicated region
  $region54: #{_decoder_layer_impl.1} parent=0 // pred_check
    _
  $region55: #{_decoder_layer_impl.1} parent=0 // pred_check_branch
    %48 = sbr.rel (0) target = $region57
  $region56: #{_decoder_layer_impl.1} parent=0 // pred_region
    _
  $region57: #{_decoder_layer_impl.1} parent=0 // pred_fallthru
    _
  // Predicated region
  $region58: #{_decoder_layer_impl.1} parent=0 // pred_check
    _
  $region59: #{_decoder_layer_impl.1} parent=0 // pred_check_branch
    %50 = sbr.rel (0) target = $region61
  $region60: #{_decoder_layer_impl.1} parent=0 // pred_region
    _
  $region61: #{_decoder_layer_impl.1} parent=0 // pred_fallthru
    _
  // Predicated region
  $region62: #{_decoder_layer_impl.1} parent=0 // pred_check
    _
  $region63: #{_decoder_layer_impl.1} parent=0 // pred_check_branch
    %52 = sbr.rel (0) target = $region65
  $region64: #{_decoder_layer_impl.1} parent=0 // pred_region
    _
  $region65: #{_decoder_layer_impl.1} parent=0 // pred_fallthru
    _
  %v53 = vld [vmem:[%s0] sm:$0xff]
  %v54 = vld [vmem:[%s0 + $0x8] sm:$0xff]
  %v55 = vld [vmem:[%s1] sm:$0xff]
  %v56 = vld [vmem:[%s1 + $0x8] sm:$0xff]
  %v57 = vld [vmem:[%s1 + $0x10] sm:$0xff]
  %v58 = vld [vmem:[%s1 + $0x18] sm:$0xff]
  %v59 = vld [vmem:[%s2] sm:$0xff]
  %v60 = vld [vmem:[%s2 + $0x8] sm:$0xff]
  %v61 = vld [vmem:[%s2 + $0x10] sm:$0xff]
  %v62 = vld [vmem:[%s2 + $0x18] sm:$0xff]
  %v63 = vld [vmem:[%s3] sm:$0x1]
  %v65 = vlaneseq
  %v66 = vshrl.u32 %v65, 7
  %v67 = vsub.s32 0, %v66
  %v68 = vrot.slane %v63, %v67
  %vm70 = vcmask 261120
  %v72 = vsel %vm70, %v53, 0
  %v75 = vsel %vm70, %v54, 0
  %77 = vmatprep.subr.mxu0 0.0
  %78 = vmatpush1.msra.mxu0 %v59
  %79 = vmatprep.subr.mxu0 0.0
  %80 = vmatpush1.msra.mxu0 %v60
  %81 = vmatprep.subr.mxu0 0.0
  %82 = vmatpush1.msra.mxu0 %v61
  %83 = vmatprep.subr.mxu0 0.0
  %84 = vmatpush1.msra.mxu0 %v62
  %85 = vmatprep.subr.mxu0 0.0
  %86 = vmatpush1.msra.mxu0 0.0
  %87 = vmatprep.subr.mxu0 0.0
  %88 = vmatpush1.msra.mxu0 0.0
  %89 = vmatprep.subr.mxu0 0.0
  %90 = vmatpush1.msra.mxu0 0.0
  %91 = vmatprep.subr.mxu0 0.0
  %92 = vmatpush1.msra.mxu0 0.0
  %93 = vmatprep.subr.mxu0 0.0
  %94 = vmatpush1.msra.mxu0 0.0
  %95 = vmatprep.subr.mxu0 0.0
  %96 = vmatpush1.msra.mxu0 0.0
  %97 = vmatprep.subr.mxu0 0.0
  %98 = vmatpush1.msra.mxu0 0.0
  %99 = vmatprep.subr.mxu0 0.0
  %100 = vmatpush1.msra.mxu0 0.0
  %101 = vmatprep.subr.mxu0 0.0
  %102 = vmatpush1.msra.mxu0 0.0
  %103 = vmatprep.subr.mxu0 0.0
  %104 = vmatpush1.msra.mxu0 0.0
  %105 = vmatprep.subr.mxu0 0.0
  %106 = vmatpush1.msra.mxu0 0.0
  %107 = vmatprep.subr.mxu0 0.0
  %108 = vmatpush1.msra.mxu0 0.0
  %109 = vmatprep.subr.mxu0 0.0
  %110 = vmatpush1.msra.mxu0 0.0
  %111 = vmatprep.subr.mxu0 0.0
  %112 = vmatpush1.msra.mxu0 0.0
  %113 = vmatprep.subr.mxu0 0.0
  %114 = vmatpush1.msra.mxu0 0.0
  %115 = vmatprep.subr.mxu0 0.0
  %116 = vmatpush1.msra.mxu0 0.0
  %117 = vmatprep.subr.mxu0 0.0
  %118 = vmatpush1.msra.mxu0 0.0
  %119 = vmatprep.subr.mxu0 0.0
  %120 = vmatpush1.msra.mxu0 0.0
  %121 = vmatprep.subr.mxu0 0.0
  %122 = vmatpush1.msra.mxu0 0.0
  %123 = vmatprep.subr.mxu0 0.0
  %124 = vmatpush1.msra.mxu0 0.0
  %125 = vmatprep.subr.mxu0 0.0
  %126 = vmatpush1.msra.mxu0 0.0
  %127 = vmatprep.subr.mxu0 0.0
  %128 = vmatpush1.msra.mxu0 0.0
  %129 = vmatprep.subr.mxu0 0.0
  %130 = vmatpush1.msra.mxu0 0.0
  %131 = vmatprep.subr.mxu0 0.0
  %132 = vmatpush1.msra.mxu0 0.0
  %133 = vmatprep.subr.mxu0 0.0
  %134 = vmatpush1.msra.mxu0 0.0
  %135 = vmatprep.subr.mxu0 0.0
  %136 = vmatpush1.msra.mxu0 0.0
  %137 = vmatprep.subr.mxu0 0.0
  %138 = vmatpush1.msra.mxu0 0.0
  %139 = vmatprep.subr.mxu0 0.0
  %140 = vmatpush1.msra.mxu0 0.0
  %141 = vmatprep.mubr.f32.mxu0 0.0
  %142 = vmatmul.mubr.f32.gmra.mrb[0].mxu0 %v72
  %v143 = vpop.f32.mrb[0].mxu0
  %v144 = vadd.f32 %v68, %v143
  %v145 = vpop.f32.mrb[0].mxu0
  %146 = vmatprep.mubr.f32.mxu0 0.0
  %147 = vmatmul.mubr.f32.gmra.mrb[0].mxu0 %v75
  %v148 = vpop.f32.mrb[0].mxu0
  %v149 = vadd.f32 %v68, %v148
  %v150 = vpop.f32.mrb[0].mxu0
  %151 = vdwg.mxu0
  %v152 = vld [vmem:[%s4] sm:$0xff]
  %v153 = vld [vmem:[%s4 + $0x8] sm:$0xff]
  %v154 = vld [vmem:[%s4 + $0x10] sm:$0xff]
  %v155 = vld [vmem:[%s4 + $0x18] sm:$0xff]
  %v156 = vld [vmem:[%s5] sm:$0x1]
  %v158 = vlaneseq
  %v159 = vshrl.u32 %v158, 7
  %v160 = vsub.s32 0, %v159
  %v161 = vrot.slane %v156, %v160
  %v164 = vsel %vm70, %v55, 0
  %v167 = vsel %vm70, %v56, 0
  %v170 = vsel %vm70, %v57, 0
  %v173 = vsel %vm70, %v58, 0
  %175 = vmatprep.subr.mxu0 0.0
  %176 = vmatpush1.msra.mxu0 %v152
  %177 = vmatprep.subr.mxu0 0.0
  %178 = vmatpush1.msra.mxu0 %v153
  %179 = vmatprep.subr.mxu0 0.0
  %180 = vmatpush1.msra.mxu0 %v154
  %181 = vmatprep.subr.mxu0 0.0
  %182 = vmatpush1.msra.mxu0 %v155
  %183 = vmatprep.subr.mxu0 0.0
  %184 = vmatpush1.msra.mxu0 0.0
  %185 = vmatprep.subr.mxu0 0.0
  %186 = vmatpush1.msra.mxu0 0.0
  %187 = vmatprep.subr.mxu0 0.0
  %188 = vmatpush1.msra.mxu0 0.0
  %189 = vmatprep.subr.mxu0 0.0
  %190 = vmatpush1.msra.mxu0 0.0
  %191 = vmatprep.subr.mxu0 0.0
  %192 = vmatpush1.msra.mxu0 0.0
  %193 = vmatprep.subr.mxu0 0.0
  %194 = vmatpush1.msra.mxu0 0.0
  %195 = vmatprep.subr.mxu0 0.0
  %196 = vmatpush1.msra.mxu0 0.0
  %197 = vmatprep.subr.mxu0 0.0
  %198 = vmatpush1.msra.mxu0 0.0
  %199 = vmatprep.subr.mxu0 0.0
  %200 = vmatpush1.msra.mxu0 0.0
  %201 = vmatprep.subr.mxu0 0.0
  %202 = vmatpush1.msra.mxu0 0.0
  %203 = vmatprep.subr.mxu0 0.0
  %204 = vmatpush1.msra.mxu0 0.0
  %205 = vmatprep.subr.mxu0 0.0
  %206 = vmatpush1.msra.mxu0 0.0
  %207 = vmatprep.subr.mxu0 0.0
  %208 = vmatpush1.msra.mxu0 0.0
  %209 = vmatprep.subr.mxu0 0.0
  %210 = vmatpush1.msra.mxu0 0.0
  %211 = vmatprep.subr.mxu0 0.0
  %212 = vmatpush1.msra.mxu0 0.0
  %213 = vmatprep.subr.mxu0 0.0
  %214 = vmatpush1.msra.mxu0 0.0
  %215 = vmatprep.subr.mxu0 0.0
  %216 = vmatpush1.msra.mxu0 0.0
  %217 = vmatprep.subr.mxu0 0.0
  %218 = vmatpush1.msra.mxu0 0.0
  %219 = vmatprep.subr.mxu0 0.0
  %220 = vmatpush1.msra.mxu0 0.0
  %221 = vmatprep.subr.mxu0 0.0
  %222 = vmatpush1.msra.mxu0 0.0
  %223 = vmatprep.subr.mxu0 0.0
  %224 = vmatpush1.msra.mxu0 0.0
  %225 = vmatprep.subr.mxu0 0.0
  %226 = vmatpush1.msra.mxu0 0.0
  %227 = vmatprep.subr.mxu0 0.0
  %228 = vmatpush1.msra.mxu0 0.0
  %229 = vmatprep.subr.mxu0 0.0
  %230 = vmatpush1.msra.mxu0 0.0
  %231 = vmatprep.subr.mxu0 0.0
  %232 = vmatpush1.msra.mxu0 0.0
  %233 = vmatprep.subr.mxu0 0.0
  %234 = vmatpush1.msra.mxu0 0.0
  %235 = vmatprep.subr.mxu0 0.0
  %236 = vmatpush1.msra.mxu0 0.0
  %237 = vmatprep.subr.mxu0 0.0
  %238 = vmatpush1.msra.mxu0 0.0
  %239 = vmatprep.mubr.f32.mxu0 0.0
  %240 = vmatmul.mubr.f32.gmra.mrb[0].mxu0 %v164
  %v241 = vpop.f32.mrb[0].mxu0
  %v242 = vadd.f32 %v161, %v241
  %v243 = vpop.f32.mrb[0].mxu0
  %244 = vmatprep.mubr.f32.mxu0 0.0
  %245 = vmatmul.mubr.f32.gmra.mrb[0].mxu0 %v167
  %v246 = vpop.f32.mrb[0].mxu0
  %v247 = vadd.f32 %v161, %v246
  %v248 = vpop.f32.mrb[0].mxu0
  %249 = vmatprep.mubr.f32.mxu0 0.0
  %250 = vmatmul.mubr.f32.gmra.mrb[0].mxu0 %v170
  %v251 = vpop.f32.mrb[0].mxu0
  %v252 = vadd.f32 %v161, %v251
  %v253 = vpop.f32.mrb[0].mxu0
  %254 = vmatprep.mubr.f32.mxu0 0.0
  %255 = vmatmul.mubr.f32.gmra.mrb[0].mxu0 %v173
  %v256 = vpop.f32.mrb[0].mxu0
  %v257 = vadd.f32 %v161, %v256
  %v258 = vpop.f32.mrb[0].mxu0
  %259 = vdwg.mxu0
  %262 = vrot.lane.b32.xlu0 %v144, 120
  %v263 = vpop.permute.xlu0 %262
  %264 = vrot.lane.b32.xlu0 %v149, 120
  %v265 = vpop.permute.xlu0 %264
  %266 = vrot.lane.b32.xlu0 %v144, 112
  %v267 = vpop.permute.xlu0 %266
  %268 = vrot.lane.b32.xlu0 %v149, 112
  %v269 = vpop.permute.xlu0 %268
  %270 = vrot.lane.b32.xlu0 %v144, 104
  %v271 = vpop.permute.xlu0 %270
  %272 = vrot.lane.b32.xlu0 %v149, 104
  %v273 = vpop.permute.xlu0 %272
  %278 = vrot.lane.b32.xlu0 %v242, 120
  %v279 = vpop.permute.xlu0 %278
  %280 = vrot.lane.b32.xlu0 %v247, 120
  %v281 = vpop.permute.xlu0 %280
  %282 = vrot.lane.b32.xlu0 %v252, 120
  %v283 = vpop.permute.xlu0 %282
  %284 = vrot.lane.b32.xlu0 %v257, 120
  %v285 = vpop.permute.xlu0 %284
  %286 = vrot.lane.b32.xlu0 %v242, 112
  %v287 = vpop.permute.xlu0 %286
  %288 = vrot.lane.b32.xlu0 %v247, 112
  %v289 = vpop.permute.xlu0 %288
  %290 = vrot.lane.b32.xlu0 %v252, 112
  %v291 = vpop.permute.xlu0 %290
  %292 = vrot.lane.b32.xlu0 %v257, 112
  %v293 = vpop.permute.xlu0 %292
  %294 = vrot.lane.b32.xlu0 %v242, 104
  %v295 = vpop.permute.xlu0 %294
  %296 = vrot.lane.b32.xlu0 %v247, 104
  %v297 = vpop.permute.xlu0 %296
  %298 = vrot.lane.b32.xlu0 %v252, 104
  %v299 = vpop.permute.xlu0 %298
  %300 = vrot.lane.b32.xlu0 %v257, 104
  %v301 = vpop.permute.xlu0 %300
  %vm302 = vcmask 64512
  %v303 = vsel %vm302, %v144, 0
  %v305 = vsel %vm302, %v242, 0
  %v307 = vsel %vm302, %v247, 0
  %309 = vmatprep.subr.mxu0 0.0
  %310 = vmatpush1.xpose.msra.mxu0 %v305
  %311 = vmatprep.subr.mxu0 0.0
  %312 = vmatpush1.xpose.msra.mxu0 %v307
  %313 = vmatprep.subr.mxu0 0.0
  %314 = vmatpush1.xpose.msra.mxu0 0.0
  %315 = vmatprep.subr.mxu0 0.0
  %316 = vmatpush1.xpose.msra.mxu0 0.0
  %317 = vmatprep.subr.mxu0 0.0
  %318 = vmatpush1.xpose.msra.mxu0 0.0
  %319 = vmatprep.subr.mxu0 0.0
  %320 = vmatpush1.xpose.msra.mxu0 0.0
  %321 = vmatprep.subr.mxu0 0.0
  %322 = vmatpush1.xpose.msra.mxu0 0.0
  %323 = vmatprep.subr.mxu0 0.0
  %324 = vmatpush1.xpose.msra.mxu0 0.0
  %325 = vmatprep.subr.mxu0 0.0
  %326 = vmatpush1.xpose.msra.mxu0 0.0
  %327 = vmatprep.subr.mxu0 0.0
  %328 = vmatpush1.xpose.msra.mxu0 0.0
  %329 = vmatprep.subr.mxu0 0.0
  %330 = vmatpush1.xpose.msra.mxu0 0.0
  %331 = vmatprep.subr.mxu0 0.0
  %332 = vmatpush1.xpose.msra.mxu0 0.0
  %333 = vmatprep.subr.mxu0 0.0
  %334 = vmatpush1.xpose.msra.mxu0 0.0
  %335 = vmatprep.subr.mxu0 0.0
  %336 = vmatpush1.xpose.msra.mxu0 0.0
  %337 = vmatprep.subr.mxu0 0.0
  %338 = vmatpush1.xpose.msra.mxu0 0.0
  %339 = vmatprep.subr.mxu0 0.0
  %340 = vmatpush1.xpose.msra.mxu0 0.0
  %341 = vmatprep.subr.mxu0 0.0
  %342 = vmatpush1.xpose.msra.mxu0 0.0
  %343 = vmatprep.subr.mxu0 0.0
  %344 = vmatpush1.xpose.msra.mxu0 0.0
  %345 = vmatprep.subr.mxu0 0.0
  %346 = vmatpush1.xpose.msra.mxu0 0.0
  %347 = vmatprep.subr.mxu0 0.0
  %348 = vmatpush1.xpose.msra.mxu0 0.0
  %349 = vmatprep.subr.mxu0 0.0
  %350 = vmatpush1.xpose.msra.mxu0 0.0
  %351 = vmatprep.subr.mxu0 0.0
  %352 = vmatpush1.xpose.msra.mxu0 0.0
  %353 = vmatprep.subr.mxu0 0.0
  %354 = vmatpush1.xpose.msra.mxu0 0.0
  %355 = vmatprep.subr.mxu0 0.0
  %356 = vmatpush1.xpose.msra.mxu0 0.0
  %357 = vmatprep.subr.mxu0 0.0
  %358 = vmatpush1.xpose.msra.mxu0 0.0
  %359 = vmatprep.subr.mxu0 0.0
  %360 = vmatpush1.xpose.msra.mxu0 0.0
  %361 = vmatprep.subr.mxu0 0.0
  %362 = vmatpush1.xpose.msra.mxu0 0.0
  %363 = vmatprep.subr.mxu0 0.0
  %364 = vmatpush1.xpose.msra.mxu0 0.0
  %365 = vmatprep.subr.mxu0 0.0
  %366 = vmatpush1.xpose.msra.mxu0 0.0
  %367 = vmatprep.subr.mxu0 0.0
  %368 = vmatpush1.xpose.msra.mxu0 0.0
  %369 = vmatprep.subr.mxu0 0.0
  %370 = vmatpush1.xpose.msra.mxu0 0.0
  %371 = vmatprep.subr.mxu0 0.0
  %372 = vmatpush1.xpose.msra.mxu0 0.0
  %373 = vmatprep.mubr.f32.mxu0 0.0
  %374 = vmatmul.mubr.f32.gmra.mrb[0].mxu0 %v303
  %v375 = vpop.f32.mrb[0].mxu0
  %v376 = vadd.f32 0.0, %v375
  %v377 = vpop.f32.mrb[0].mxu0
  %378 = vdwg.mxu0
  %v379 = vsel %vm302, %v149, 0
  %v381 = vsel %vm302, %v252, 0
  %v383 = vsel %vm302, %v257, 0
  %385 = vmatprep.subr.mxu0 0.0
  %386 = vmatpush1.xpose.msra.mxu0 %v381
  %387 = vmatprep.subr.mxu0 0.0
  %388 = vmatpush1.xpose.msra.mxu0 %v383
  %389 = vmatprep.subr.mxu0 0.0
  %390 = vmatpush1.xpose.msra.mxu0 0.0
  %391 = vmatprep.subr.mxu0 0.0
  %392 = vmatpush1.xpose.msra.mxu0 0.0
  %393 = vmatprep.subr.mxu0 0.0
  %394 = vmatpush1.xpose.msra.mxu0 0.0
  %395 = vmatprep.subr.mxu0 0.0
  %396 = vmatpush1.xpose.msra.mxu0 0.0
  %397 = vmatprep.subr.mxu0 0.0
  %398 = vmatpush1.xpose.msra.mxu0 0.0
  %399 = vmatprep.subr.mxu0 0.0
  %400 = vmatpush1.xpose.msra.mxu0 0.0
  %401 = vmatprep.subr.mxu0 0.0
  %402 = vmatpush1.xpose.msra.mxu0 0.0
  %403 = vmatprep.subr.mxu0 0.0
  %404 = vmatpush1.xpose.msra.mxu0 0.0
  %405 = vmatprep.subr.mxu0 0.0
  %406 = vmatpush1.xpose.msra.mxu0 0.0
  %407 = vmatprep.subr.mxu0 0.0
  %408 = vmatpush1.xpose.msra.mxu0 0.0
  %409 = vmatprep.subr.mxu0 0.0
  %410 = vmatpush1.xpose.msra.mxu0 0.0
  %411 = vmatprep.subr.mxu0 0.0
  %412 = vmatpush1.xpose.msra.mxu0 0.0
  %413 = vmatprep.subr.mxu0 0.0
  %414 = vmatpush1.xpose.msra.mxu0 0.0
  %415 = vmatprep.subr.mxu0 0.0
  %416 = vmatpush1.xpose.msra.mxu0 0.0
  %417 = vmatprep.subr.mxu0 0.0
  %418 = vmatpush1.xpose.msra.mxu0 0.0
  %419 = vmatprep.subr.mxu0 0.0
  %420 = vmatpush1.xpose.msra.mxu0 0.0
  %421 = vmatprep.subr.mxu0 0.0
  %422 = vmatpush1.xpose.msra.mxu0 0.0
  %423 = vmatprep.subr.mxu0 0.0
  %424 = vmatpush1.xpose.msra.mxu0 0.0
  %425 = vmatprep.subr.mxu0 0.0
  %426 = vmatpush1.xpose.msra.mxu0 0.0
  %427 = vmatprep.subr.mxu0 0.0
  %428 = vmatpush1.xpose.msra.mxu0 0.0
  %429 = vmatprep.subr.mxu0 0.0
  %430 = vmatpush1.xpose.msra.mxu0 0.0
  %431 = vmatprep.subr.mxu0 0.0
  %432 = vmatpush1.xpose.msra.mxu0 0.0
  %433 = vmatprep.subr.mxu0 0.0
  %434 = vmatpush1.xpose.msra.mxu0 0.0
  %435 = vmatprep.subr.mxu0 0.0
  %436 = vmatpush1.xpose.msra.mxu0 0.0
  %437 = vmatprep.subr.mxu0 0.0
  %438 = vmatpush1.xpose.msra.mxu0 0.0
  %439 = vmatprep.subr.mxu0 0.0
  %440 = vmatpush1.xpose.msra.mxu0 0.0
  %441 = vmatprep.subr.mxu0 0.0
  %442 = vmatpush1.xpose.msra.mxu0 0.0
  %443 = vmatprep.subr.mxu0 0.0
  %444 = vmatpush1.xpose.msra.mxu0 0.0
  %445 = vmatprep.subr.mxu0 0.0
  %446 = vmatpush1.xpose.msra.mxu0 0.0
  %447 = vmatprep.subr.mxu0 0.0
  %448 = vmatpush1.xpose.msra.mxu0 0.0
  %449 = vmatprep.mubr.f32.mxu0 0.0
  %450 = vmatmul.mubr.f32.gmra.mrb[0].mxu0 %v379
  %v451 = vpop.f32.mrb[0].mxu0
  %v452 = vadd.f32 0.0, %v451
  %v453 = vpop.f32.mrb[0].mxu0
  %454 = vdwg.mxu0
  %v455 = vsel %vm302, %v263, 0
  %v457 = vsel %vm302, %v279, 0
  %v459 = vsel %vm302, %v281, 0
  %461 = vmatprep.subr.mxu0 0.0
  %462 = vmatpush1.xpose.msra.mxu0 %v457
  %463 = vmatprep.subr.mxu0 0.0
  %464 = vmatpush1.xpose.msra.mxu0 %v459
  %465 = vmatprep.subr.mxu0 0.0
  %466 = vmatpush1.xpose.msra.mxu0 0.0
  %467 = vmatprep.subr.mxu0 0.0
  %468 = vmatpush1.xpose.msra.mxu0 0.0
  %469 = vmatprep.subr.mxu0 0.0
  %470 = vmatpush1.xpose.msra.mxu0 0.0
  %471 = vmatprep.subr.mxu0 0.0
  %472 = vmatpush1.xpose.msra.mxu0 0.0
  %473 = vmatprep.subr.mxu0 0.0
  %474 = vmatpush1.xpose.msra.mxu0 0.0
  %475 = vmatprep.subr.mxu0 0.0
  %476 = vmatpush1.xpose.msra.mxu0 0.0
  %477 = vmatprep.subr.mxu0 0.0
  %478 = vmatpush1.xpose.msra.mxu0 0.0
  %479 = vmatprep.subr.mxu0 0.0
  %480 = vmatpush1.xpose.msra.mxu0 0.0
  %481 = vmatprep.subr.mxu0 0.0
  %482 = vmatpush1.xpose.msra.mxu0 0.0
  %483 = vmatprep.subr.mxu0 0.0
  %484 = vmatpush1.xpose.msra.mxu0 0.0
  %485 = vmatprep.subr.mxu0 0.0
  %486 = vmatpush1.xpose.msra.mxu0 0.0
  %487 = vmatprep.subr.mxu0 0.0
  %488 = vmatpush1.xpose.msra.mxu0 0.0
  %489 = vmatprep.subr.mxu0 0.0
  %490 = vmatpush1.xpose.msra.mxu0 0.0
  %491 = vmatprep.subr.mxu0 0.0
  %492 = vmatpush1.xpose.msra.mxu0 0.0
  %493 = vmatprep.subr.mxu0 0.0
  %494 = vmatpush1.xpose.msra.mxu0 0.0
  %495 = vmatprep.subr.mxu0 0.0
  %496 = vmatpush1.xpose.msra.mxu0 0.0
  %497 = vmatprep.subr.mxu0 0.0
  %498 = vmatpush1.xpose.msra.mxu0 0.0
  %499 = vmatprep.subr.mxu0 0.0
  %500 = vmatpush1.xpose.msra.mxu0 0.0
  %501 = vmatprep.subr.mxu0 0.0
  %502 = vmatpush1.xpose.msra.mxu0 0.0
  %503 = vmatprep.subr.mxu0 0.0
  %504 = vmatpush1.xpose.msra.mxu0 0.0
  %505 = vmatprep.subr.mxu0 0.0
  %506 = vmatpush1.xpose.msra.mxu0 0.0
  %507 = vmatprep.subr.mxu0 0.0
  %508 = vmatpush1.xpose.msra.mxu0 0.0
  %509 = vmatprep.subr.mxu0 0.0
  %510 = vmatpush1.xpose.msra.mxu0 0.0
  %511 = vmatprep.subr.mxu0 0.0
  %512 = vmatpush1.xpose.msra.mxu0 0.0
  %513 = vmatprep.subr.mxu0 0.0
  %514 = vmatpush1.xpose.msra.mxu0 0.0
  %515 = vmatprep.subr.mxu0 0.0
  %516 = vmatpush1.xpose.msra.mxu0 0.0
  %517 = vmatprep.subr.mxu0 0.0
  %518 = vmatpush1.xpose.msra.mxu0 0.0
  %519 = vmatprep.subr.mxu0 0.0
  %520 = vmatpush1.xpose.msra.mxu0 0.0
  %521 = vmatprep.subr.mxu0 0.0
  %522 = vmatpush1.xpose.msra.mxu0 0.0
  %523 = vmatprep.subr.mxu0 0.0
  %524 = vmatpush1.xpose.msra.mxu0 0.0
  %525 = vmatprep.mubr.f32.mxu0 0.0
  %526 = vmatmul.mubr.f32.gmra.mrb[0].mxu0 %v455
  %v527 = vpop.f32.mrb[0].mxu0
  %v528 = vadd.f32 0.0, %v527
  %v529 = vpop.f32.mrb[0].mxu0
  %530 = vdwg.mxu0
  %v531 = vsel %vm302, %v265, 0
  %v533 = vsel %vm302, %v283, 0
  %v535 = vsel %vm302, %v285, 0
  %537 = vmatprep.subr.mxu0 0.0
  %538 = vmatpush1.xpose.msra.mxu0 %v533
  %539 = vmatprep.subr.mxu0 0.0
  %540 = vmatpush1.xpose.msra.mxu0 %v535
  %541 = vmatprep.subr.mxu0 0.0
  %542 = vmatpush1.xpose.msra.mxu0 0.0
  %543 = vmatprep.subr.mxu0 0.0
  %544 = vmatpush1.xpose.msra.mxu0 0.0
  %545 = vmatprep.subr.mxu0 0.0
  %546 = vmatpush1.xpose.msra.mxu0 0.0
  %547 = vmatprep.subr.mxu0 0.0
  %548 = vmatpush1.xpose.msra.mxu0 0.0
  %549 = vmatprep.subr.mxu0 0.0
  %550 = vmatpush1.xpose.msra.mxu0 0.0
  %551 = vmatprep.subr.mxu0 0.0
  %552 = vmatpush1.xpose.msra.mxu0 0.0
  %553 = vmatprep.subr.mxu0 0.0
  %554 = vmatpush1.xpose.msra.mxu0 0.0
  %555 = vmatprep.subr.mxu0 0.0
  %556 = vmatpush1.xpose.msra.mxu0 0.0
  %557 = vmatprep.subr.mxu0 0.0
  %558 = vmatpush1.xpose.msra.mxu0 0.0
  %559 = vmatprep.subr.mxu0 0.0
  %560 = vmatpush1.xpose.msra.mxu0 0.0
  %561 = vmatprep.subr.mxu0 0.0
  %562 = vmatpush1.xpose.msra.mxu0 0.0
  %563 = vmatprep.subr.mxu0 0.0
  %564 = vmatpush1.xpose.msra.mxu0 0.0
  %565 = vmatprep.subr.mxu0 0.0
  %566 = vmatpush1.xpose.msra.mxu0 0.0
  %567 = vmatprep.subr.mxu0 0.0
  %568 = vmatpush1.xpose.msra.mxu0 0.0
  %569 = vmatprep.subr.mxu0 0.0
  %570 = vmatpush1.xpose.msra.mxu0 0.0
  %571 = vmatprep.subr.mxu0 0.0
  %572 = vmatpush1.xpose.msra.mxu0 0.0
  %573 = vmatprep.subr.mxu0 0.0
  %574 = vmatpush1.xpose.msra.mxu0 0.0
  %575 = vmatprep.subr.mxu0 0.0
  %576 = vmatpush1.xpose.msra.mxu0 0.0
  %577 = vmatprep.subr.mxu0 0.0
  %578 = vmatpush1.xpose.msra.mxu0 0.0
  %579 = vmatprep.subr.mxu0 0.0
  %580 = vmatpush1.xpose.msra.mxu0 0.0
  %581 = vmatprep.subr.mxu0 0.0
  %582 = vmatpush1.xpose.msra.mxu0 0.0
  %583 = vmatprep.subr.mxu0 0.0
  %584 = vmatpush1.xpose.msra.mxu0 0.0
  %585 = vmatprep.subr.mxu0 0.0
  %586 = vmatpush1.xpose.msra.mxu0 0.0
  %587 = vmatprep.subr.mxu0 0.0
  %588 = vmatpush1.xpose.msra.mxu0 0.0
  %589 = vmatprep.subr.mxu0 0.0
  %590 = vmatpush1.xpose.msra.mxu0 0.0
  %591 = vmatprep.subr.mxu0 0.0
  %592 = vmatpush1.xpose.msra.mxu0 0.0
  %593 = vmatprep.subr.mxu0 0.0
  %594 = vmatpush1.xpose.msra.mxu0 0.0
  %595 = vmatprep.subr.mxu0 0.0
  %596 = vmatpush1.xpose.msra.mxu0 0.0
  %597 = vmatprep.subr.mxu0 0.0
  %598 = vmatpush1.xpose.msra.mxu0 0.0
  %599 = vmatprep.subr.mxu0 0.0
  %600 = vmatpush1.xpose.msra.mxu0 0.0
  %601 = vmatprep.mubr.f32.mxu0 0.0
  %602 = vmatmul.mubr.f32.gmra.mrb[0].mxu0 %v531
  %v603 = vpop.f32.mrb[0].mxu0
  %v604 = vadd.f32 0.0, %v603
  %v605 = vpop.f32.mrb[0].mxu0
  %606 = vdwg.mxu0
  %v607 = vsel %vm302, %v267, 0
  %v609 = vsel %vm302, %v287, 0
  %v611 = vsel %vm302, %v289, 0
  %613 = vmatprep.subr.mxu0 0.0
  %614 = vmatpush1.xpose.msra.mxu0 %v609
  %615 = vmatprep.subr.mxu0 0.0
  %616 = vmatpush1.xpose.msra.mxu0 %v611
  %617 = vmatprep.subr.mxu0 0.0
  %618 = vmatpush1.xpose.msra.mxu0 0.0
  %619 = vmatprep.subr.mxu0 0.0
  %620 = vmatpush1.xpose.msra.mxu0 0.0
  %621 = vmatprep.subr.mxu0 0.0
  %622 = vmatpush1.xpose.msra.mxu0 0.0
  %623 = vmatprep.subr.mxu0 0.0
  %624 = vmatpush1.xpose.msra.mxu0 0.0
  %625 = vmatprep.subr.mxu0 0.0
  %626 = vmatpush1.xpose.msra.mxu0 0.0
  %627 = vmatprep.subr.mxu0 0.0
  %628 = vmatpush1.xpose.msra.mxu0 0.0
  %629 = vmatprep.subr.mxu0 0.0
  %630 = vmatpush1.xpose.msra.mxu0 0.0
  %631 = vmatprep.subr.mxu0 0.0
  %632 = vmatpush1.xpose.msra.mxu0 0.0
  %633 = vmatprep.subr.mxu0 0.0
  %634 = vmatpush1.xpose.msra.mxu0 0.0
  %635 = vmatprep.subr.mxu0 0.0
  %636 = vmatpush1.xpose.msra.mxu0 0.0
  %637 = vmatprep.subr.mxu0 0.0
  %638 = vmatpush1.xpose.msra.mxu0 0.0
  %639 = vmatprep.subr.mxu0 0.0
  %640 = vmatpush1.xpose.msra.mxu0 0.0
  %641 = vmatprep.subr.mxu0 0.0
  %642 = vmatpush1.xpose.msra.mxu0 0.0
  %643 = vmatprep.subr.mxu0 0.0
  %644 = vmatpush1.xpose.msra.mxu0 0.0
  %645 = vmatprep.subr.mxu0 0.0
  %646 = vmatpush1.xpose.msra.mxu0 0.0
  %647 = vmatprep.subr.mxu0 0.0
  %648 = vmatpush1.xpose.msra.mxu0 0.0
  %649 = vmatprep.subr.mxu0 0.0
  %650 = vmatpush1.xpose.msra.mxu0 0.0
  %651 = vmatprep.subr.mxu0 0.0
  %652 = vmatpush1.xpose.msra.mxu0 0.0
  %653 = vmatprep.subr.mxu0 0.0
  %654 = vmatpush1.xpose.msra.mxu0 0.0
  %655 = vmatprep.subr.mxu0 0.0
  %656 = vmatpush1.xpose.msra.mxu0 0.0
  %657 = vmatprep.subr.mxu0 0.0
  %658 = vmatpush1.xpose.msra.mxu0 0.0
  %659 = vmatprep.subr.mxu0 0.0
  %660 = vmatpush1.xpose.msra.mxu0 0.0
  %661 = vmatprep.subr.mxu0 0.0
  %662 = vmatpush1.xpose.msra.mxu0 0.0
  %663 = vmatprep.subr.mxu0 0.0
  %664 = vmatpush1.xpose.msra.mxu0 0.0
  %665 = vmatprep.subr.mxu0 0.0
  %666 = vmatpush1.xpose.msra.mxu0 0.0
  %667 = vmatprep.subr.mxu0 0.0
  %668 = vmatpush1.xpose.msra.mxu0 0.0
  %669 = vmatprep.subr.mxu0 0.0
  %670 = vmatpush1.xpose.msra.mxu0 0.0
  %671 = vmatprep.subr.mxu0 0.0
  %672 = vmatpush1.xpose.msra.mxu0 0.0
  %673 = vmatprep.subr.mxu0 0.0
  %674 = vmatpush1.xpose.msra.mxu0 0.0
  %675 = vmatprep.subr.mxu0 0.0
  %676 = vmatpush1.xpose.msra.mxu0 0.0
  %677 = vmatprep.mubr.f32.mxu0 0.0
  %678 = vmatmul.mubr.f32.gmra.mrb[0].mxu0 %v607
  %v679 = vpop.f32.mrb[0].mxu0
  %v680 = vadd.f32 0.0, %v679
  %v681 = vpop.f32.mrb[0].mxu0
  %682 = vdwg.mxu0
  %v683 = vsel %vm302, %v269, 0
  %v685 = vsel %vm302, %v291, 0
  %v687 = vsel %vm302, %v293, 0
  %689 = vmatprep.subr.mxu0 0.0
  %690 = vmatpush1.xpose.msra.mxu0 %v685
  %691 = vmatprep.subr.mxu0 0.0
  %692 = vmatpush1.xpose.msra.mxu0 %v687
  %693 = vmatprep.subr.mxu0 0.0
  %694 = vmatpush1.xpose.msra.mxu0 0.0
  %695 = vmatprep.subr.mxu0 0.0
  %696 = vmatpush1.xpose.msra.mxu0 0.0
  %697 = vmatprep.subr.mxu0 0.0
  %698 = vmatpush1.xpose.msra.mxu0 0.0
  %699 = vmatprep.subr.mxu0 0.0
  %700 = vmatpush1.xpose.msra.mxu0 0.0
  %701 = vmatprep.subr.mxu0 0.0
  %702 = vmatpush1.xpose.msra.mxu0 0.0
  %703 = vmatprep.subr.mxu0 0.0
  %704 = vmatpush1.xpose.msra.mxu0 0.0
  %705 = vmatprep.subr.mxu0 0.0
  %706 = vmatpush1.xpose.msra.mxu0 0.0
  %707 = vmatprep.subr.mxu0 0.0
  %708 = vmatpush1.xpose.msra.mxu0 0.0
  %709 = vmatprep.subr.mxu0 0.0
  %710 = vmatpush1.xpose.msra.mxu0 0.0
  %711 = vmatprep.subr.mxu0 0.0
  %712 = vmatpush1.xpose.msra.mxu0 0.0
  %713 = vmatprep.subr.mxu0 0.0
  %714 = vmatpush1.xpose.msra.mxu0 0.0
  %715 = vmatprep.subr.mxu0 0.0
  %716 = vmatpush1.xpose.msra.mxu0 0.0
  %717 = vmatprep.subr.mxu0 0.0
  %718 = vmatpush1.xpose.msra.mxu0 0.0
  %719 = vmatprep.subr.mxu0 0.0
  %720 = vmatpush1.xpose.msra.mxu0 0.0
  %721 = vmatprep.subr.mxu0 0.0
  %722 = vmatpush1.xpose.msra.mxu0 0.0
  %723 = vmatprep.subr.mxu0 0.0
  %724 = vmatpush1.xpose.msra.mxu0 0.0
  %725 = vmatprep.subr.mxu0 0.0
  %726 = vmatpush1.xpose.msra.mxu0 0.0
  %727 = vmatprep.subr.mxu0 0.0
  %728 = vmatpush1.xpose.msra.mxu0 0.0
  %729 = vmatprep.subr.mxu0 0.0
  %730 = vmatpush1.xpose.msra.mxu0 0.0
  %731 = vmatprep.subr.mxu0 0.0
  %732 = vmatpush1.xpose.msra.mxu0 0.0
  %733 = vmatprep.subr.mxu0 0.0
  %734 = vmatpush1.xpose.msra.mxu0 0.0
  %735 = vmatprep.subr.mxu0 0.0
  %736 = vmatpush1.xpose.msra.mxu0 0.0
  %737 = vmatprep.subr.mxu0 0.0
  %738 = vmatpush1.xpose.msra.mxu0 0.0
  %739 = vmatprep.subr.mxu0 0.0
  %740 = vmatpush1.xpose.msra.mxu0 0.0
  %741 = vmatprep.subr.mxu0 0.0
  %742 = vmatpush1.xpose.msra.mxu0 0.0
  %743 = vmatprep.subr.mxu0 0.0
  %744 = vmatpush1.xpose.msra.mxu0 0.0
  %745 = vmatprep.subr.mxu0 0.0
  %746 = vmatpush1.xpose.msra.mxu0 0.0
  %747 = vmatprep.subr.mxu0 0.0
  %748 = vmatpush1.xpose.msra.mxu0 0.0
  %749 = vmatprep.subr.mxu0 0.0
  %750 = vmatpush1.xpose.msra.mxu0 0.0
  %751 = vmatprep.subr.mxu0 0.0
  %752 = vmatpush1.xpose.msra.mxu0 0.0
  %753 = vmatprep.mubr.f32.mxu0 0.0
  %754 = vmatmul.mubr.f32.gmra.mrb[0].mxu0 %v683
  %v755 = vpop.f32.mrb[0].mxu0
  %v756 = vadd.f32 0.0, %v755
  %v757 = vpop.f32.mrb[0].mxu0
  %758 = vdwg.mxu0
  %v759 = vsel %vm302, %v271, 0
  %v761 = vsel %vm302, %v295, 0
  %v763 = vsel %vm302, %v297, 0
  %765 = vmatprep.subr.mxu0 0.0
  %766 = vmatpush1.xpose.msra.mxu0 %v761
  %767 = vmatprep.subr.mxu0 0.0
  %768 = vmatpush1.xpose.msra.mxu0 %v763
  %769 = vmatprep.subr.mxu0 0.0
  %770 = vmatpush1.xpose.msra.mxu0 0.0
  %771 = vmatprep.subr.mxu0 0.0
  %772 = vmatpush1.xpose.msra.mxu0 0.0
  %773 = vmatprep.subr.mxu0 0.0
  %774 = vmatpush1.xpose.msra.mxu0 0.0
  %775 = vmatprep.subr.mxu0 0.0
  %776 = vmatpush1.xpose.msra.mxu0 0.0
  %777 = vmatprep.subr.mxu0 0.0
  %778 = vmatpush1.xpose.msra.mxu0 0.0
  %779 = vmatprep.subr.mxu0 0.0
  %780 = vmatpush1.xpose.msra.mxu0 0.0
  %781 = vmatprep.subr.mxu0 0.0
  %782 = vmatpush1.xpose.msra.mxu0 0.0
  %783 = vmatprep.subr.mxu0 0.0
  %784 = vmatpush1.xpose.msra.mxu0 0.0
  %785 = vmatprep.subr.mxu0 0.0
  %786 = vmatpush1.xpose.msra.mxu0 0.0
  %787 = vmatprep.subr.mxu0 0.0
  %788 = vmatpush1.xpose.msra.mxu0 0.0
  %789 = vmatprep.subr.mxu0 0.0
  %790 = vmatpush1.xpose.msra.mxu0 0.0
  %791 = vmatprep.subr.mxu0 0.0
  %792 = vmatpush1.xpose.msra.mxu0 0.0
  %793 = vmatprep.subr.mxu0 0.0
  %794 = vmatpush1.xpose.msra.mxu0 0.0
  %795 = vmatprep.subr.mxu0 0.0
  %796 = vmatpush1.xpose.msra.mxu0 0.0
  %797 = vmatprep.subr.mxu0 0.0
  %798 = vmatpush1.xpose.msra.mxu0 0.0
  %799 = vmatprep.subr.mxu0 0.0
  %800 = vmatpush1.xpose.msra.mxu0 0.0
  %801 = vmatprep.subr.mxu0 0.0
  %802 = vmatpush1.xpose.msra.mxu0 0.0
  %803 = vmatprep.subr.mxu0 0.0
  %804 = vmatpush1.xpose.msra.mxu0 0.0
  %805 = vmatprep.subr.mxu0 0.0
  %806 = vmatpush1.xpose.msra.mxu0 0.0
  %807 = vmatprep.subr.mxu0 0.0
  %808 = vmatpush1.xpose.msra.mxu0 0.0
  %809 = vmatprep.subr.mxu0 0.0
  %810 = vmatpush1.xpose.msra.mxu0 0.0
  %811 = vmatprep.subr.mxu0 0.0
  %812 = vmatpush1.xpose.msra.mxu0 0.0
  %813 = vmatprep.subr.mxu0 0.0
  %814 = vmatpush1.xpose.msra.mxu0 0.0
  %815 = vmatprep.subr.mxu0 0.0
  %816 = vmatpush1.xpose.msra.mxu0 0.0
  %817 = vmatprep.subr.mxu0 0.0
  %818 = vmatpush1.xpose.msra.mxu0 0.0
  %819 = vmatprep.subr.mxu0 0.0
  %820 = vmatpush1.xpose.msra.mxu0 0.0
  %821 = vmatprep.subr.mxu0 0.0
  %822 = vmatpush1.xpose.msra.mxu0 0.0
  %823 = vmatprep.subr.mxu0 0.0
  %824 = vmatpush1.xpose.msra.mxu0 0.0
  %825 = vmatprep.subr.mxu0 0.0
  %826 = vmatpush1.xpose.msra.mxu0 0.0
  %827 = vmatprep.subr.mxu0 0.0
  %828 = vmatpush1.xpose.msra.mxu0 0.0
  %829 = vmatprep.mubr.f32.mxu0 0.0
  %830 = vmatmul.mubr.f32.gmra.mrb[0].mxu0 %v759
  %v831 = vpop.f32.mrb[0].mxu0
  %v832 = vadd.f32 0.0, %v831
  %v833 = vpop.f32.mrb[0].mxu0
  %834 = vdwg.mxu0
  %v835 = vsel %vm302, %v273, 0
  %v837 = vsel %vm302, %v299, 0
  %v839 = vsel %vm302, %v301, 0
  %841 = vmatprep.subr.mxu0 0.0
  %842 = vmatpush1.xpose.msra.mxu0 %v837
  %843 = vmatprep.subr.mxu0 0.0
  %844 = vmatpush1.xpose.msra.mxu0 %v839
  %845 = vmatprep.subr.mxu0 0.0
  %846 = vmatpush1.xpose.msra.mxu0 0.0
  %847 = vmatprep.subr.mxu0 0.0
  %848 = vmatpush1.xpose.msra.mxu0 0.0
  %849 = vmatprep.subr.mxu0 0.0
  %850 = vmatpush1.xpose.msra.mxu0 0.0
  %851 = vmatprep.subr.mxu0 0.0
  %852 = vmatpush1.xpose.msra.mxu0 0.0
  %853 = vmatprep.subr.mxu0 0.0
  %854 = vmatpush1.xpose.msra.mxu0 0.0
  %855 = vmatprep.subr.mxu0 0.0
  %856 = vmatpush1.xpose.msra.mxu0 0.0
  %857 = vmatprep.subr.mxu0 0.0
  %858 = vmatpush1.xpose.msra.mxu0 0.0
  %859 = vmatprep.subr.mxu0 0.0
  %860 = vmatpush1.xpose.msra.mxu0 0.0
  %861 = vmatprep.subr.mxu0 0.0
  %862 = vmatpush1.xpose.msra.mxu0 0.0
  %863 = vmatprep.subr.mxu0 0.0
  %864 = vmatpush1.xpose.msra.mxu0 0.0
  %865 = vmatprep.subr.mxu0 0.0
  %866 = vmatpush1.xpose.msra.mxu0 0.0
  %867 = vmatprep.subr.mxu0 0.0
  %868 = vmatpush1.xpose.msra.mxu0 0.0
  %869 = vmatprep.subr.mxu0 0.0
  %870 = vmatpush1.xpose.msra.mxu0 0.0
  %871 = vmatprep.subr.mxu0 0.0
  %872 = vmatpush1.xpose.msra.mxu0 0.0
  %873 = vmatprep.subr.mxu0 0.0
  %874 = vmatpush1.xpose.msra.mxu0 0.0
  %875 = vmatprep.subr.mxu0 0.0
  %876 = vmatpush1.xpose.msra.mxu0 0.0
  %877 = vmatprep.subr.mxu0 0.0
  %878 = vmatpush1.xpose.msra.mxu0 0.0
  %879 = vmatprep.subr.mxu0 0.0
  %880 = vmatpush1.xpose.msra.mxu0 0.0
  %881 = vmatprep.subr.mxu0 0.0
  %882 = vmatpush1.xpose.msra.mxu0 0.0
  %883 = vmatprep.subr.mxu0 0.0
  %884 = vmatpush1.xpose.msra.mxu0 0.0
  %885 = vmatprep.subr.mxu0 0.0
  %886 = vmatpush1.xpose.msra.mxu0 0.0
  %887 = vmatprep.subr.mxu0 0.0
  %888 = vmatpush1.xpose.msra.mxu0 0.0
  %889 = vmatprep.subr.mxu0 0.0
  %890 = vmatpush1.xpose.msra.mxu0 0.0
  %891 = vmatprep.subr.mxu0 0.0
  %892 = vmatpush1.xpose.msra.mxu0 0.0
  %893 = vmatprep.subr.mxu0 0.0
  %894 = vmatpush1.xpose.msra.mxu0 0.0
  %895 = vmatprep.subr.mxu0 0.0
  %896 = vmatpush1.xpose.msra.mxu0 0.0
  %897 = vmatprep.subr.mxu0 0.0
  %898 = vmatpush1.xpose.msra.mxu0 0.0
  %899 = vmatprep.subr.mxu0 0.0
  %900 = vmatpush1.xpose.msra.mxu0 0.0
  %901 = vmatprep.subr.mxu0 0.0
  %902 = vmatpush1.xpose.msra.mxu0 0.0
  %903 = vmatprep.subr.mxu0 0.0
  %904 = vmatpush1.xpose.msra.mxu0 0.0
  %905 = vmatprep.mubr.f32.mxu0 0.0
  %906 = vmatmul.mubr.f32.gmra.mrb[0].mxu0 %v835
  %v907 = vpop.f32.mrb[0].mxu0
  %v908 = vadd.f32 0.0, %v907
  %v909 = vpop.f32.mrb[0].mxu0
  %910 = vdwg.mxu0
  %vm911 = vcmask 130048
  %v912 = vsel %vm911, %v376, -inf
  %913 = vmax.xlane.f32.xlu0 %v912
  %v914 = vpop.xlane.xlu0 %913
  %v915 = vsel %vm911, %v452, -inf
  %916 = vmax.xlane.f32.xlu0 %v915
  %v917 = vpop.xlane.xlu0 %916
  %v918 = vsel %vm911, %v528, -inf
  %919 = vmax.xlane.f32.xlu0 %v918
  %v920 = vpop.xlane.xlu0 %919
  %v921 = vsel %vm911, %v604, -inf
  %922 = vmax.xlane.f32.xlu0 %v921
  %v923 = vpop.xlane.xlu0 %922
  %v924 = vsel %vm911, %v680, -inf
  %925 = vmax.xlane.f32.xlu0 %v924
  %v926 = vpop.xlane.xlu0 %925
  %v927 = vsel %vm911, %v756, -inf
  %928 = vmax.xlane.f32.xlu0 %v927
  %v929 = vpop.xlane.xlu0 %928
  %v930 = vsel %vm911, %v832, -inf
  %931 = vmax.xlane.f32.xlu0 %v930
  %v932 = vpop.xlane.xlu0 %931
  %v933 = vsel %vm911, %v908, -inf
  %934 = vmax.xlane.f32.xlu0 %v933
  %v935 = vpop.xlane.xlu0 %934
  %v936 = vsub.f32 %v376, %v914
  %v937 = vsub.f32 %v452, %v917
  %v938 = vsub.f32 %v528, %v920
  %v939 = vsub.f32 %v604, %v923
  %v940 = vsub.f32 %v680, %v926
  %v941 = vsub.f32 %v756, %v929
  %v942 = vsub.f32 %v832, %v932
  %v943 = vsub.f32 %v908, %v935
  %v944 = vmul.f32 %v936, 1.442695
  %v945 = vpow.pop %v944
  %v946 = vmul.f32 %v937, 1.442695
  %v947 = vpow.pop %v946
  %v948 = vmul.f32 %v938, 1.442695
  %v949 = vpow.pop %v948
  %v950 = vmul.f32 %v939, 1.442695
  %v951 = vpow.pop %v950
  %v952 = vmul.f32 %v940, 1.442695
  %v953 = vpow.pop %v952
  %v954 = vmul.f32 %v941, 1.442695
  %v955 = vpow.pop %v954
  %v956 = vmul.f32 %v942, 1.442695
  %v957 = vpow.pop %v956
  %v958 = vmul.f32 %v943, 1.442695
  %v959 = vpow.pop %v958
  %v960 = vsel %vm911, %v945, 0.0
  %961 = vadd.xlane.f32.xlu0 %v960
  %v962 = vpop.xlane.xlu0 %961
  %v963 = vsel %vm911, %v947, 0.0
  %964 = vadd.xlane.f32.xlu0 %v963
  %v965 = vpop.xlane.xlu0 %964
  %v966 = vsel %vm911, %v949, 0.0
  %967 = vadd.xlane.f32.xlu0 %v966
  %v968 = vpop.xlane.xlu0 %967
  %v969 = vsel %vm911, %v951, 0.0
  %970 = vadd.xlane.f32.xlu0 %v969
  %v971 = vpop.xlane.xlu0 %970
  %v972 = vsel %vm911, %v953, 0.0
  %973 = vadd.xlane.f32.xlu0 %v972
  %v974 = vpop.xlane.xlu0 %973
  %v975 = vsel %vm911, %v955, 0.0
  %976 = vadd.xlane.f32.xlu0 %v975
  %v977 = vpop.xlane.xlu0 %976
  %v978 = vsel %vm911, %v957, 0.0
  %979 = vadd.xlane.f32.xlu0 %v978
  %v980 = vpop.xlane.xlu0 %979
  %v981 = vsel %vm911, %v959, 0.0
  %982 = vadd.xlane.f32.xlu0 %v981
  %v983 = vpop.xlane.xlu0 %982
  %v984 = vrcp.pop %v962
  %v985 = vrcp.pop %v965
  %v986 = vrcp.pop %v968
  %v987 = vrcp.pop %v971
  %v988 = vrcp.pop %v974
  %v989 = vrcp.pop %v977
  %v990 = vrcp.pop %v980
  %v991 = vrcp.pop %v983
  %v992 = vmul.f32 %v945, %v984
  %v993 = vmul.f32 %v947, %v985
  %v994 = vmul.f32 %v949, %v986
  %v995 = vmul.f32 %v951, %v987
  %v996 = vmul.f32 %v953, %v988
  %v997 = vmul.f32 %v955, %v989
  %v998 = vmul.f32 %v957, %v990
  %v999 = vmul.f32 %v959, %v991
  %1000 = vrot.lane.b32.xlu0 %v242, 96
  %v1001 = vpop.permute.xlu0 %1000
  %1002 = vrot.lane.b32.xlu0 %v247, 96
  %v1003 = vpop.permute.xlu0 %1002
  %v1007 = vsel %vm911, %v992, 0
  %1009 = vmatprep.subr.mxu0 0.0
  %1010 = vmatpush1.msra.mxu0 %v1001
  %1011 = vmatprep.subr.mxu0 0.0
  %1012 = vmatpush1.msra.mxu0 %v1003
  %1013 = vmatprep.subr.mxu0 0.0
  %1014 = vmatpush1.msra.mxu0 0.0
  %1015 = vmatprep.subr.mxu0 0.0
  %1016 = vmatpush1.msra.mxu0 0.0
  %1017 = vmatprep.subr.mxu0 0.0
  %1018 = vmatpush1.msra.mxu0 0.0
  %1019 = vmatprep.subr.mxu0 0.0
  %1020 = vmatpush1.msra.mxu0 0.0
  %1021 = vmatprep.subr.mxu0 0.0
  %1022 = vmatpush1.msra.mxu0 0.0
  %1023 = vmatprep.subr.mxu0 0.0
  %1024 = vmatpush1.msra.mxu0 0.0
  %1025 = vmatprep.subr.mxu0 0.0
  %1026 = vmatpush1.msra.mxu0 0.0
  %1027 = vmatprep.subr.mxu0 0.0
  %1028 = vmatpush1.msra.mxu0 0.0
  %1029 = vmatprep.subr.mxu0 0.0
  %1030 = vmatpush1.msra.mxu0 0.0
  %1031 = vmatprep.subr.mxu0 0.0
  %1032 = vmatpush1.msra.mxu0 0.0
  %1033 = vmatprep.subr.mxu0 0.0
  %1034 = vmatpush1.msra.mxu0 0.0
  %1035 = vmatprep.subr.mxu0 0.0
  %1036 = vmatpush1.msra.mxu0 0.0
  %1037 = vmatprep.subr.mxu0 0.0
  %1038 = vmatpush1.msra.mxu0 0.0
  %1039 = vmatprep.subr.mxu0 0.0
  %1040 = vmatpush1.msra.mxu0 0.0
  %1041 = vmatprep.subr.mxu0 0.0
  %1042 = vmatpush1.msra.mxu0 0.0
  %1043 = vmatprep.subr.mxu0 0.0
  %1044 = vmatpush1.msra.mxu0 0.0
  %1045 = vmatprep.subr.mxu0 0.0
  %1046 = vmatpush1.msra.mxu0 0.0
  %1047 = vmatprep.subr.mxu0 0.0
  %1048 = vmatpush1.msra.mxu0 0.0
  %1049 = vmatprep.subr.mxu0 0.0
  %1050 = vmatpush1.msra.mxu0 0.0
  %1051 = vmatprep.subr.mxu0 0.0
  %1052 = vmatpush1.msra.mxu0 0.0
  %1053 = vmatprep.subr.mxu0 0.0
  %1054 = vmatpush1.msra.mxu0 0.0
  %1055 = vmatprep.subr.mxu0 0.0
  %1056 = vmatpush1.msra.mxu0 0.0
  %1057 = vmatprep.subr.mxu0 0.0
  %1058 = vmatpush1.msra.mxu0 0.0
  %1059 = vmatprep.subr.mxu0 0.0
  %1060 = vmatpush1.msra.mxu0 0.0
  %1061 = vmatprep.subr.mxu0 0.0
  %1062 = vmatpush1.msra.mxu0 0.0
  %1063 = vmatprep.subr.mxu0 0.0
  %1064 = vmatpush1.msra.mxu0 0.0
  %1065 = vmatprep.subr.mxu0 0.0
  %1066 = vmatpush1.msra.mxu0 0.0
  %1067 = vmatprep.subr.mxu0 0.0
  %1068 = vmatpush1.msra.mxu0 0.0
  %1069 = vmatprep.subr.mxu0 0.0
  %1070 = vmatpush1.msra.mxu0 0.0
  %1071 = vmatprep.subr.mxu0 0.0
  %1072 = vmatpush1.msra.mxu0 0.0
  %1073 = vmatprep.mubr.f32.mxu0 0.0
  %1074 = vmatmul.mubr.f32.gmra.mrb[0].mxu0 %v1007
  %v1075 = vpop.f32.mrb[0].mxu0
  %v1076 = vadd.f32 0.0, %v1075
  %v1077 = vpop.f32.mrb[0].mxu0
  %1078 = vdwg.mxu0
  %1079 = vrot.lane.b32.xlu0 %v252, 96
  %v1080 = vpop.permute.xlu0 %1079
  %1081 = vrot.lane.b32.xlu0 %v257, 96
  %v1082 = vpop.permute.xlu0 %1081
  %v1086 = vsel %vm911, %v993, 0
  %1088 = vmatprep.subr.mxu0 0.0
  %1089 = vmatpush1.msra.mxu0 %v1080
  %1090 = vmatprep.subr.mxu0 0.0
  %1091 = vmatpush1.msra.mxu0 %v1082
  %1092 = vmatprep.subr.mxu0 0.0
  %1093 = vmatpush1.msra.mxu0 0.0
  %1094 = vmatprep.subr.mxu0 0.0
  %1095 = vmatpush1.msra.mxu0 0.0
  %1096 = vmatprep.subr.mxu0 0.0
  %1097 = vmatpush1.msra.mxu0 0.0
  %1098 = vmatprep.subr.mxu0 0.0
  %1099 = vmatpush1.msra.mxu0 0.0
  %1100 = vmatprep.subr.mxu0 0.0
  %1101 = vmatpush1.msra.mxu0 0.0
  %1102 = vmatprep.subr.mxu0 0.0
  %1103 = vmatpush1.msra.mxu0 0.0
  %1104 = vmatprep.subr.mxu0 0.0
  %1105 = vmatpush1.msra.mxu0 0.0
  %1106 = vmatprep.subr.mxu0 0.0
  %1107 = vmatpush1.msra.mxu0 0.0
  %1108 = vmatprep.subr.mxu0 0.0
  %1109 = vmatpush1.msra.mxu0 0.0
  %1110 = vmatprep.subr.mxu0 0.0
  %1111 = vmatpush1.msra.mxu0 0.0
  %1112 = vmatprep.subr.mxu0 0.0
  %1113 = vmatpush1.msra.mxu0 0.0
  %1114 = vmatprep.subr.mxu0 0.0
  %1115 = vmatpush1.msra.mxu0 0.0
  %1116 = vmatprep.subr.mxu0 0.0
  %1117 = vmatpush1.msra.mxu0 0.0
  %1118 = vmatprep.subr.mxu0 0.0
  %1119 = vmatpush1.msra.mxu0 0.0
  %1120 = vmatprep.subr.mxu0 0.0
  %1121 = vmatpush1.msra.mxu0 0.0
  %1122 = vmatprep.subr.mxu0 0.0
  %1123 = vmatpush1.msra.mxu0 0.0
  %1124 = vmatprep.subr.mxu0 0.0
  %1125 = vmatpush1.msra.mxu0 0.0
  %1126 = vmatprep.subr.mxu0 0.0
  %1127 = vmatpush1.msra.mxu0 0.0
  %1128 = vmatprep.subr.mxu0 0.0
  %1129 = vmatpush1.msra.mxu0 0.0
  %1130 = vmatprep.subr.mxu0 0.0
  %1131 = vmatpush1.msra.mxu0 0.0
  %1132 = vmatprep.subr.mxu0 0.0
  %1133 = vmatpush1.msra.mxu0 0.0
  %1134 = vmatprep.subr.mxu0 0.0
  %1135 = vmatpush1.msra.mxu0 0.0
  %1136 = vmatprep.subr.mxu0 0.0
  %1137 = vmatpush1.msra.mxu0 0.0
  %1138 = vmatprep.subr.mxu0 0.0
  %1139 = vmatpush1.msra.mxu0 0.0
  %1140 = vmatprep.subr.mxu0 0.0
  %1141 = vmatpush1.msra.mxu0 0.0
  %1142 = vmatprep.subr.mxu0 0.0
  %1143 = vmatpush1.msra.mxu0 0.0
  %1144 = vmatprep.subr.mxu0 0.0
  %1145 = vmatpush1.msra.mxu0 0.0
  %1146 = vmatprep.subr.mxu0 0.0
  %1147 = vmatpush1.msra.mxu0 0.0
  %1148 = vmatprep.subr.mxu0 0.0
  %1149 = vmatpush1.msra.mxu0 0.0
  %1150 = vmatprep.subr.mxu0 0.0
  %1151 = vmatpush1.msra.mxu0 0.0
  %1152 = vmatprep.mubr.f32.mxu0 0.0
  %1153 = vmatmul.mubr.f32.gmra.mrb[0].mxu0 %v1086
  %v1154 = vpop.f32.mrb[0].mxu0
  %v1155 = vadd.f32 0.0, %v1154
  %v1156 = vpop.f32.mrb[0].mxu0
  %1157 = vdwg.mxu0
  %1158 = vrot.lane.b32.xlu0 %v279, 96
  %v1159 = vpop.permute.xlu0 %1158
  %1160 = vrot.lane.b32.xlu0 %v281, 96
  %v1161 = vpop.permute.xlu0 %1160
  %v1165 = vsel %vm911, %v994, 0
  %1167 = vmatprep.subr.mxu0 0.0
  %1168 = vmatpush1.msra.mxu0 %v1159
  %1169 = vmatprep.subr.mxu0 0.0
  %1170 = vmatpush1.msra.mxu0 %v1161
  %1171 = vmatprep.subr.mxu0 0.0
  %1172 = vmatpush1.msra.mxu0 0.0
  %1173 = vmatprep.subr.mxu0 0.0
  %1174 = vmatpush1.msra.mxu0 0.0
  %1175 = vmatprep.subr.mxu0 0.0
  %1176 = vmatpush1.msra.mxu0 0.0
  %1177 = vmatprep.subr.mxu0 0.0
  %1178 = vmatpush1.msra.mxu0 0.0
  %1179 = vmatprep.subr.mxu0 0.0
  %1180 = vmatpush1.msra.mxu0 0.0
  %1181 = vmatprep.subr.mxu0 0.0
  %1182 = vmatpush1.msra.mxu0 0.0
  %1183 = vmatprep.subr.mxu0 0.0
  %1184 = vmatpush1.msra.mxu0 0.0
  %1185 = vmatprep.subr.mxu0 0.0
  %1186 = vmatpush1.msra.mxu0 0.0
  %1187 = vmatprep.subr.mxu0 0.0
  %1188 = vmatpush1.msra.mxu0 0.0
  %1189 = vmatprep.subr.mxu0 0.0
  %1190 = vmatpush1.msra.mxu0 0.0
  %1191 = vmatprep.subr.mxu0 0.0
  %1192 = vmatpush1.msra.mxu0 0.0
  %1193 = vmatprep.subr.mxu0 0.0
  %1194 = vmatpush1.msra.mxu0 0.0
  %1195 = vmatprep.subr.mxu0 0.0
  %1196 = vmatpush1.msra.mxu0 0.0
  %1197 = vmatprep.subr.mxu0 0.0
  %1198 = vmatpush1.msra.mxu0 0.0
  %1199 = vmatprep.subr.mxu0 0.0
  %1200 = vmatpush1.msra.mxu0 0.0
  %1201 = vmatprep.subr.mxu0 0.0
  %1202 = vmatpush1.msra.mxu0 0.0
  %1203 = vmatprep.subr.mxu0 0.0
  %1204 = vmatpush1.msra.mxu0 0.0
  %1205 = vmatprep.subr.mxu0 0.0
  %1206 = vmatpush1.msra.mxu0 0.0
  %1207 = vmatprep.subr.mxu0 0.0
  %1208 = vmatpush1.msra.mxu0 0.0
  %1209 = vmatprep.subr.mxu0 0.0
  %1210 = vmatpush1.msra.mxu0 0.0
  %1211 = vmatprep.subr.mxu0 0.0
  %1212 = vmatpush1.msra.mxu0 0.0
  %1213 = vmatprep.subr.mxu0 0.0
  %1214 = vmatpush1.msra.mxu0 0.0
  %1215 = vmatprep.subr.mxu0 0.0
  %1216 = vmatpush1.msra.mxu0 0.0
  %1217 = vmatprep.subr.mxu0 0.0
  %1218 = vmatpush1.msra.mxu0 0.0
  %1219 = vmatprep.subr.mxu0 0.0
  %1220 = vmatpush1.msra.mxu0 0.0
  %1221 = vmatprep.subr.mxu0 0.0
  %1222 = vmatpush1.msra.mxu0 0.0
  %1223 = vmatprep.subr.mxu0 0.0
  %1224 = vmatpush1.msra.mxu0 0.0
  %1225 = vmatprep.subr.mxu0 0.0
  %1226 = vmatpush1.msra.mxu0 0.0
  %1227 = vmatprep.subr.mxu0 0.0
  %1228 = vmatpush1.msra.mxu0 0.0
  %1229 = vmatprep.subr.mxu0 0.0
  %1230 = vmatpush1.msra.mxu0 0.0
  %1231 = vmatprep.mubr.f32.mxu0 0.0
  %1232 = vmatmul.mubr.f32.gmra.mrb[0].mxu0 %v1165
  %v1233 = vpop.f32.mrb[0].mxu0
  %v1234 = vadd.f32 0.0, %v1233
  %v1235 = vpop.f32.mrb[0].mxu0
  %1236 = vdwg.mxu0
  %1237 = vrot.lane.b32.xlu0 %v283, 96
  %v1238 = vpop.permute.xlu0 %1237
  %1239 = vrot.lane.b32.xlu0 %v285, 96
  %v1240 = vpop.permute.xlu0 %1239
  %v1244 = vsel %vm911, %v995, 0
  %1246 = vmatprep.subr.mxu0 0.0
  %1247 = vmatpush1.msra.mxu0 %v1238
  %1248 = vmatprep.subr.mxu0 0.0
  %1249 = vmatpush1.msra.mxu0 %v1240
  %1250 = vmatprep.subr.mxu0 0.0
  %1251 = vmatpush1.msra.mxu0 0.0
  %1252 = vmatprep.subr.mxu0 0.0
  %1253 = vmatpush1.msra.mxu0 0.0
  %1254 = vmatprep.subr.mxu0 0.0
  %1255 = vmatpush1.msra.mxu0 0.0
  %1256 = vmatprep.subr.mxu0 0.0
  %1257 = vmatpush1.msra.mxu0 0.0
  %1258 = vmatprep.subr.mxu0 0.0
  %1259 = vmatpush1.msra.mxu0 0.0
  %1260 = vmatprep.subr.mxu0 0.0
  %1261 = vmatpush1.msra.mxu0 0.0
  %1262 = vmatprep.subr.mxu0 0.0
  %1263 = vmatpush1.msra.mxu0 0.0
  %1264 = vmatprep.subr.mxu0 0.0
  %1265 = vmatpush1.msra.mxu0 0.0
  %1266 = vmatprep.subr.mxu0 0.0
  %1267 = vmatpush1.msra.mxu0 0.0
  %1268 = vmatprep.subr.mxu0 0.0
  %1269 = vmatpush1.msra.mxu0 0.0
  %1270 = vmatprep.subr.mxu0 0.0
  %1271 = vmatpush1.msra.mxu0 0.0
  %1272 = vmatprep.subr.mxu0 0.0
  %1273 = vmatpush1.msra.mxu0 0.0
  %1274 = vmatprep.subr.mxu0 0.0
  %1275 = vmatpush1.msra.mxu0 0.0
  %1276 = vmatprep.subr.mxu0 0.0
  %1277 = vmatpush1.msra.mxu0 0.0
  %1278 = vmatprep.subr.mxu0 0.0
  %1279 = vmatpush1.msra.mxu0 0.0
  %1280 = vmatprep.subr.mxu0 0.0
  %1281 = vmatpush1.msra.mxu0 0.0
  %1282 = vmatprep.subr.mxu0 0.0
  %1283 = vmatpush1.msra.mxu0 0.0
  %1284 = vmatprep.subr.mxu0 0.0
  %1285 = vmatpush1.msra.mxu0 0.0
  %1286 = vmatprep.subr.mxu0 0.0
  %1287 = vmatpush1.msra.mxu0 0.0
  %1288 = vmatprep.subr.mxu0 0.0
  %1289 = vmatpush1.msra.mxu0 0.0
  %1290 = vmatprep.subr.mxu0 0.0
  %1291 = vmatpush1.msra.mxu0 0.0
  %1292 = vmatprep.subr.mxu0 0.0
  %1293 = vmatpush1.msra.mxu0 0.0
  %1294 = vmatprep.subr.mxu0 0.0
  %1295 = vmatpush1.msra.mxu0 0.0
  %1296 = vmatprep.subr.mxu0 0.0
  %1297 = vmatpush1.msra.mxu0 0.0
  %1298 = vmatprep.subr.mxu0 0.0
  %1299 = vmatpush1.msra.mxu0 0.0
  %1300 = vmatprep.subr.mxu0 0.0
  %1301 = vmatpush1.msra.mxu0 0.0
  %1302 = vmatprep.subr.mxu0 0.0
  %1303 = vmatpush1.msra.mxu0 0.0
  %1304 = vmatprep.subr.mxu0 0.0
  %1305 = vmatpush1.msra.mxu0 0.0
  %1306 = vmatprep.subr.mxu0 0.0
  %1307 = vmatpush1.msra.mxu0 0.0
  %1308 = vmatprep.subr.mxu0 0.0
  %1309 = vmatpush1.msra.mxu0 0.0
  %1310 = vmatprep.mubr.f32.mxu0 0.0
  %1311 = vmatmul.mubr.f32.gmra.mrb[0].mxu0 %v1244
  %v1312 = vpop.f32.mrb[0].mxu0
  %v1313 = vadd.f32 0.0, %v1312
  %v1314 = vpop.f32.mrb[0].mxu0
  %1315 = vdwg.mxu0
  %1316 = vrot.lane.b32.xlu0 %v287, 96
  %v1317 = vpop.permute.xlu0 %1316
  %1318 = vrot.lane.b32.xlu0 %v289, 96
  %v1319 = vpop.permute.xlu0 %1318
  %v1323 = vsel %vm911, %v996, 0
  %1325 = vmatprep.subr.mxu0 0.0
  %1326 = vmatpush1.msra.mxu0 %v1317
  %1327 = vmatprep.subr.mxu0 0.0
  %1328 = vmatpush1.msra.mxu0 %v1319
  %1329 = vmatprep.subr.mxu0 0.0
  %1330 = vmatpush1.msra.mxu0 0.0
  %1331 = vmatprep.subr.mxu0 0.0
  %1332 = vmatpush1.msra.mxu0 0.0
  %1333 = vmatprep.subr.mxu0 0.0
  %1334 = vmatpush1.msra.mxu0 0.0
  %1335 = vmatprep.subr.mxu0 0.0
  %1336 = vmatpush1.msra.mxu0 0.0
  %1337 = vmatprep.subr.mxu0 0.0
  %1338 = vmatpush1.msra.mxu0 0.0
  %1339 = vmatprep.subr.mxu0 0.0
  %1340 = vmatpush1.msra.mxu0 0.0
  %1341 = vmatprep.subr.mxu0 0.0
  %1342 = vmatpush1.msra.mxu0 0.0
  %1343 = vmatprep.subr.mxu0 0.0
  %1344 = vmatpush1.msra.mxu0 0.0
  %1345 = vmatprep.subr.mxu0 0.0
  %1346 = vmatpush1.msra.mxu0 0.0
  %1347 = vmatprep.subr.mxu0 0.0
  %1348 = vmatpush1.msra.mxu0 0.0
  %1349 = vmatprep.subr.mxu0 0.0
  %1350 = vmatpush1.msra.mxu0 0.0
  %1351 = vmatprep.subr.mxu0 0.0
  %1352 = vmatpush1.msra.mxu0 0.0
  %1353 = vmatprep.subr.mxu0 0.0
  %1354 = vmatpush1.msra.mxu0 0.0
  %1355 = vmatprep.subr.mxu0 0.0
  %1356 = vmatpush1.msra.mxu0 0.0
  %1357 = vmatprep.subr.mxu0 0.0
  %1358 = vmatpush1.msra.mxu0 0.0
  %1359 = vmatprep.subr.mxu0 0.0
  %1360 = vmatpush1.msra.mxu0 0.0
  %1361 = vmatprep.subr.mxu0 0.0
  %1362 = vmatpush1.msra.mxu0 0.0
  %1363 = vmatprep.subr.mxu0 0.0
  %1364 = vmatpush1.msra.mxu0 0.0
  %1365 = vmatprep.subr.mxu0 0.0
  %1366 = vmatpush1.msra.mxu0 0.0
  %1367 = vmatprep.subr.mxu0 0.0
  %1368 = vmatpush1.msra.mxu0 0.0
  %1369 = vmatprep.subr.mxu0 0.0
  %1370 = vmatpush1.msra.mxu0 0.0
  %1371 = vmatprep.subr.mxu0 0.0
  %1372 = vmatpush1.msra.mxu0 0.0
  %1373 = vmatprep.subr.mxu0 0.0
  %1374 = vmatpush1.msra.mxu0 0.0
  %1375 = vmatprep.subr.mxu0 0.0
  %1376 = vmatpush1.msra.mxu0 0.0
  %1377 = vmatprep.subr.mxu0 0.0
  %1378 = vmatpush1.msra.mxu0 0.0
  %1379 = vmatprep.subr.mxu0 0.0
  %1380 = vmatpush1.msra.mxu0 0.0
  %1381 = vmatprep.subr.mxu0 0.0
  %1382 = vmatpush1.msra.mxu0 0.0
  %1383 = vmatprep.subr.mxu0 0.0
  %1384 = vmatpush1.msra.mxu0 0.0
  %1385 = vmatprep.subr.mxu0 0.0
  %1386 = vmatpush1.msra.mxu0 0.0
  %1387 = vmatprep.subr.mxu0 0.0
  %1388 = vmatpush1.msra.mxu0 0.0
  %1389 = vmatprep.mubr.f32.mxu0 0.0
  %1390 = vmatmul.mubr.f32.gmra.mrb[0].mxu0 %v1323
  %v1391 = vpop.f32.mrb[0].mxu0
  %v1392 = vadd.f32 0.0, %v1391
  %v1393 = vpop.f32.mrb[0].mxu0
  %1394 = vdwg.mxu0
  %1395 = vrot.lane.b32.xlu0 %v291, 96
  %v1396 = vpop.permute.xlu0 %1395
  %1397 = vrot.lane.b32.xlu0 %v293, 96
  %v1398 = vpop.permute.xlu0 %1397
  %v1402 = vsel %vm911, %v997, 0
  %1404 = vmatprep.subr.mxu0 0.0
  %1405 = vmatpush1.msra.mxu0 %v1396
  %1406 = vmatprep.subr.mxu0 0.0
  %1407 = vmatpush1.msra.mxu0 %v1398
  %1408 = vmatprep.subr.mxu0 0.0
  %1409 = vmatpush1.msra.mxu0 0.0
  %1410 = vmatprep.subr.mxu0 0.0
  %1411 = vmatpush1.msra.mxu0 0.0
  %1412 = vmatprep.subr.mxu0 0.0
  %1413 = vmatpush1.msra.mxu0 0.0
  %1414 = vmatprep.subr.mxu0 0.0
  %1415 = vmatpush1.msra.mxu0 0.0
  %1416 = vmatprep.subr.mxu0 0.0
  %1417 = vmatpush1.msra.mxu0 0.0
  %1418 = vmatprep.subr.mxu0 0.0
  %1419 = vmatpush1.msra.mxu0 0.0
  %1420 = vmatprep.subr.mxu0 0.0
  %1421 = vmatpush1.msra.mxu0 0.0
  %1422 = vmatprep.subr.mxu0 0.0
  %1423 = vmatpush1.msra.mxu0 0.0
  %1424 = vmatprep.subr.mxu0 0.0
  %1425 = vmatpush1.msra.mxu0 0.0
  %1426 = vmatprep.subr.mxu0 0.0
  %1427 = vmatpush1.msra.mxu0 0.0
  %1428 = vmatprep.subr.mxu0 0.0
  %1429 = vmatpush1.msra.mxu0 0.0
  %1430 = vmatprep.subr.mxu0 0.0
  %1431 = vmatpush1.msra.mxu0 0.0
  %1432 = vmatprep.subr.mxu0 0.0
  %1433 = vmatpush1.msra.mxu0 0.0
  %1434 = vmatprep.subr.mxu0 0.0
  %1435 = vmatpush1.msra.mxu0 0.0
  %1436 = vmatprep.subr.mxu0 0.0
  %1437 = vmatpush1.msra.mxu0 0.0
  %1438 = vmatprep.subr.mxu0 0.0
  %1439 = vmatpush1.msra.mxu0 0.0
  %1440 = vmatprep.subr.mxu0 0.0
  %1441 = vmatpush1.msra.mxu0 0.0
  %1442 = vmatprep.subr.mxu0 0.0
  %1443 = vmatpush1.msra.mxu0 0.0
  %1444 = vmatprep.subr.mxu0 0.0
  %1445 = vmatpush1.msra.mxu0 0.0
  %1446 = vmatprep.subr.mxu0 0.0
  %1447 = vmatpush1.msra.mxu0 0.0
  %1448 = vmatprep.subr.mxu0 0.0
  %1449 = vmatpush1.msra.mxu0 0.0
  %1450 = vmatprep.subr.mxu0 0.0
  %1451 = vmatpush1.msra.mxu0 0.0
  %1452 = vmatprep.subr.mxu0 0.0
  %1453 = vmatpush1.msra.mxu0 0.0
  %1454 = vmatprep.subr.mxu0 0.0
  %1455 = vmatpush1.msra.mxu0 0.0
  %1456 = vmatprep.subr.mxu0 0.0
  %1457 = vmatpush1.msra.mxu0 0.0
  %1458 = vmatprep.subr.mxu0 0.0
  %1459 = vmatpush1.msra.mxu0 0.0
  %1460 = vmatprep.subr.mxu0 0.0
  %1461 = vmatpush1.msra.mxu0 0.0
  %1462 = vmatprep.subr.mxu0 0.0
  %1463 = vmatpush1.msra.mxu0 0.0
  %1464 = vmatprep.subr.mxu0 0.0
  %1465 = vmatpush1.msra.mxu0 0.0
  %1466 = vmatprep.subr.mxu0 0.0
  %1467 = vmatpush1.msra.mxu0 0.0
  %1468 = vmatprep.mubr.f32.mxu0 0.0
  %1469 = vmatmul.mubr.f32.gmra.mrb[0].mxu0 %v1402
  %v1470 = vpop.f32.mrb[0].mxu0
  %v1471 = vadd.f32 0.0, %v1470
  %v1472 = vpop.f32.mrb[0].mxu0
  %1473 = vdwg.mxu0
  %1474 = vrot.lane.b32.xlu0 %v295, 96
  %v1475 = vpop.permute.xlu0 %1474
  %1476 = vrot.lane.b32.xlu0 %v297, 96
  %v1477 = vpop.permute.xlu0 %1476
  %v1481 = vsel %vm911, %v998, 0
  %1483 = vmatprep.subr.mxu0 0.0
  %1484 = vmatpush1.msra.mxu0 %v1475
  %1485 = vmatprep.subr.mxu0 0.0
  %1486 = vmatpush1.msra.mxu0 %v1477
  %1487 = vmatprep.subr.mxu0 0.0
  %1488 = vmatpush1.msra.mxu0 0.0
  %1489 = vmatprep.subr.mxu0 0.0
  %1490 = vmatpush1.msra.mxu0 0.0
  %1491 = vmatprep.subr.mxu0 0.0
  %1492 = vmatpush1.msra.mxu0 0.0
  %1493 = vmatprep.subr.mxu0 0.0
  %1494 = vmatpush1.msra.mxu0 0.0
  %1495 = vmatprep.subr.mxu0 0.0
  %1496 = vmatpush1.msra.mxu0 0.0
  %1497 = vmatprep.subr.mxu0 0.0
  %1498 = vmatpush1.msra.mxu0 0.0
  %1499 = vmatprep.subr.mxu0 0.0
  %1500 = vmatpush1.msra.mxu0 0.0
  %1501 = vmatprep.subr.mxu0 0.0
  %1502 = vmatpush1.msra.mxu0 0.0
  %1503 = vmatprep.subr.mxu0 0.0
  %1504 = vmatpush1.msra.mxu0 0.0
  %1505 = vmatprep.subr.mxu0 0.0
  %1506 = vmatpush1.msra.mxu0 0.0
  %1507 = vmatprep.subr.mxu0 0.0
  %1508 = vmatpush1.msra.mxu0 0.0
  %1509 = vmatprep.subr.mxu0 0.0
  %1510 = vmatpush1.msra.mxu0 0.0
  %1511 = vmatprep.subr.mxu0 0.0
  %1512 = vmatpush1.msra.mxu0 0.0
  %1513 = vmatprep.subr.mxu0 0.0
  %1514 = vmatpush1.msra.mxu0 0.0
  %1515 = vmatprep.subr.mxu0 0.0
  %1516 = vmatpush1.msra.mxu0 0.0
  %1517 = vmatprep.subr.mxu0 0.0
  %1518 = vmatpush1.msra.mxu0 0.0
  %1519 = vmatprep.subr.mxu0 0.0
  %1520 = vmatpush1.msra.mxu0 0.0
  %1521 = vmatprep.subr.mxu0 0.0
  %1522 = vmatpush1.msra.mxu0 0.0
  %1523 = vmatprep.subr.mxu0 0.0
  %1524 = vmatpush1.msra.mxu0 0.0
  %1525 = vmatprep.subr.mxu0 0.0
  %1526 = vmatpush1.msra.mxu0 0.0
  %1527 = vmatprep.subr.mxu0 0.0
  %1528 = vmatpush1.msra.mxu0 0.0
  %1529 = vmatprep.subr.mxu0 0.0
  %1530 = vmatpush1.msra.mxu0 0.0
  %1531 = vmatprep.subr.mxu0 0.0
  %1532 = vmatpush1.msra.mxu0 0.0
  %1533 = vmatprep.subr.mxu0 0.0
  %1534 = vmatpush1.msra.mxu0 0.0
  %1535 = vmatprep.subr.mxu0 0.0
  %1536 = vmatpush1.msra.mxu0 0.0
  %1537 = vmatprep.subr.mxu0 0.0
  %1538 = vmatpush1.msra.mxu0 0.0
  %1539 = vmatprep.subr.mxu0 0.0
  %1540 = vmatpush1.msra.mxu0 0.0
  %1541 = vmatprep.subr.mxu0 0.0
  %1542 = vmatpush1.msra.mxu0 0.0
  %1543 = vmatprep.subr.mxu0 0.0
  %1544 = vmatpush1.msra.mxu0 0.0
  %1545 = vmatprep.subr.mxu0 0.0
  %1546 = vmatpush1.msra.mxu0 0.0
  %1547 = vmatprep.mubr.f32.mxu0 0.0
  %1548 = vmatmul.mubr.f32.gmra.mrb[0].mxu0 %v1481
  %v1549 = vpop.f32.mrb[0].mxu0
  %v1550 = vadd.f32 0.0, %v1549
  %v1551 = vpop.f32.mrb[0].mxu0
  %1552 = vdwg.mxu0
  %1553 = vrot.lane.b32.xlu0 %v299, 96
  %v1554 = vpop.permute.xlu0 %1553
  %1555 = vrot.lane.b32.xlu0 %v301, 96
  %v1556 = vpop.permute.xlu0 %1555
  %v1560 = vsel %vm911, %v999, 0
  %1562 = vmatprep.subr.mxu0 0.0
  %1563 = vmatpush1.msra.mxu0 %v1554
  %1564 = vmatprep.subr.mxu0 0.0
  %1565 = vmatpush1.msra.mxu0 %v1556
  %1566 = vmatprep.subr.mxu0 0.0
  %1567 = vmatpush1.msra.mxu0 0.0
  %1568 = vmatprep.subr.mxu0 0.0
  %1569 = vmatpush1.msra.mxu0 0.0
  %1570 = vmatprep.subr.mxu0 0.0
  %1571 = vmatpush1.msra.mxu0 0.0
  %1572 = vmatprep.subr.mxu0 0.0
  %1573 = vmatpush1.msra.mxu0 0.0
  %1574 = vmatprep.subr.mxu0 0.0
  %1575 = vmatpush1.msra.mxu0 0.0
  %1576 = vmatprep.subr.mxu0 0.0
  %1577 = vmatpush1.msra.mxu0 0.0
  %1578 = vmatprep.subr.mxu0 0.0
  %1579 = vmatpush1.msra.mxu0 0.0
  %1580 = vmatprep.subr.mxu0 0.0
  %1581 = vmatpush1.msra.mxu0 0.0
  %1582 = vmatprep.subr.mxu0 0.0
  %1583 = vmatpush1.msra.mxu0 0.0
  %1584 = vmatprep.subr.mxu0 0.0
  %1585 = vmatpush1.msra.mxu0 0.0
  %1586 = vmatprep.subr.mxu0 0.0
  %1587 = vmatpush1.msra.mxu0 0.0
  %1588 = vmatprep.subr.mxu0 0.0
  %1589 = vmatpush1.msra.mxu0 0.0
  %1590 = vmatprep.subr.mxu0 0.0
  %1591 = vmatpush1.msra.mxu0 0.0
  %1592 = vmatprep.subr.mxu0 0.0
  %1593 = vmatpush1.msra.mxu0 0.0
  %1594 = vmatprep.subr.mxu0 0.0
  %1595 = vmatpush1.msra.mxu0 0.0
  %1596 = vmatprep.subr.mxu0 0.0
  %1597 = vmatpush1.msra.mxu0 0.0
  %1598 = vmatprep.subr.mxu0 0.0
  %1599 = vmatpush1.msra.mxu0 0.0
  %1600 = vmatprep.subr.mxu0 0.0
  %1601 = vmatpush1.msra.mxu0 0.0
  %1602 = vmatprep.subr.mxu0 0.0
  %1603 = vmatpush1.msra.mxu0 0.0
  %1604 = vmatprep.subr.mxu0 0.0
  %1605 = vmatpush1.msra.mxu0 0.0
  %1606 = vmatprep.subr.mxu0 0.0
  %1607 = vmatpush1.msra.mxu0 0.0
  %1608 = vmatprep.subr.mxu0 0.0
  %1609 = vmatpush1.msra.mxu0 0.0
  %1610 = vmatprep.subr.mxu0 0.0
  %1611 = vmatpush1.msra.mxu0 0.0
  %1612 = vmatprep.subr.mxu0 0.0
  %1613 = vmatpush1.msra.mxu0 0.0
  %1614 = vmatprep.subr.mxu0 0.0
  %1615 = vmatpush1.msra.mxu0 0.0
  %1616 = vmatprep.subr.mxu0 0.0
  %1617 = vmatpush1.msra.mxu0 0.0
  %1618 = vmatprep.subr.mxu0 0.0
  %1619 = vmatpush1.msra.mxu0 0.0
  %1620 = vmatprep.subr.mxu0 0.0
  %1621 = vmatpush1.msra.mxu0 0.0
  %1622 = vmatprep.subr.mxu0 0.0
  %1623 = vmatpush1.msra.mxu0 0.0
  %1624 = vmatprep.subr.mxu0 0.0
  %1625 = vmatpush1.msra.mxu0 0.0
  %1626 = vmatprep.mubr.f32.mxu0 0.0
  %1627 = vmatmul.mubr.f32.gmra.mrb[0].mxu0 %v1560
  %v1628 = vpop.f32.mrb[0].mxu0
  %v1629 = vadd.f32 0.0, %v1628
  %v1630 = vpop.f32.mrb[0].mxu0
  %1631 = vdwg.mxu0
  %v1632 = vld [vmem:[%s6] sm:$0xff]
  %v1633 = vld [vmem:[%s6 + $0x8] sm:$0xff]
  %v1634 = vld [vmem:[%s6 + $0x10] sm:$0xff]
  %v1635 = vld [vmem:[%s6 + $0x18] sm:$0xff]
  %v1637 = vsel %vm302, %v1076, 0
  %v1640 = vsel %vm302, %v1155, 0
  %1642 = vmatprep.subr.mxu0 0.0
  %1643 = vmatpush1.msra.mxu0 %v1632
  %1644 = vmatprep.subr.mxu0 0.0
  %1645 = vmatpush1.msra.mxu0 0.0
  %1646 = vmatprep.subr.mxu0 0.0
  %1647 = vmatpush1.msra.mxu0 0.0
  %1648 = vmatprep.subr.mxu0 0.0
  %1649 = vmatpush1.msra.mxu0 0.0
  %1650 = vmatprep.subr.mxu0 0.0
  %1651 = vmatpush1.msra.mxu0 0.0
  %1652 = vmatprep.subr.mxu0 0.0
  %1653 = vmatpush1.msra.mxu0 0.0
  %1654 = vmatprep.subr.mxu0 0.0
  %1655 = vmatpush1.msra.mxu0 0.0
  %1656 = vmatprep.subr.mxu0 0.0
  %1657 = vmatpush1.msra.mxu0 0.0
  %1658 = vmatprep.subr.mxu0 0.0
  %1659 = vmatpush1.msra.mxu0 0.0
  %1660 = vmatprep.subr.mxu0 0.0
  %1661 = vmatpush1.msra.mxu0 0.0
  %1662 = vmatprep.subr.mxu0 0.0
  %1663 = vmatpush1.msra.mxu0 0.0
  %1664 = vmatprep.subr.mxu0 0.0
  %1665 = vmatpush1.msra.mxu0 0.0
  %1666 = vmatprep.subr.mxu0 0.0
  %1667 = vmatpush1.msra.mxu0 0.0
  %1668 = vmatprep.subr.mxu0 0.0
  %1669 = vmatpush1.msra.mxu0 0.0
  %1670 = vmatprep.subr.mxu0 0.0
  %1671 = vmatpush1.msra.mxu0 0.0
  %1672 = vmatprep.subr.mxu0 0.0
  %1673 = vmatpush1.msra.mxu0 0.0
  %1674 = vmatprep.subr.mxu0 0.0
  %1675 = vmatpush1.msra.mxu0 0.0
  %1676 = vmatprep.subr.mxu0 0.0
  %1677 = vmatpush1.msra.mxu0 0.0
  %1678 = vmatprep.subr.mxu0 0.0
  %1679 = vmatpush1.msra.mxu0 0.0
  %1680 = vmatprep.subr.mxu0 0.0
  %1681 = vmatpush1.msra.mxu0 0.0
  %1682 = vmatprep.subr.mxu0 0.0
  %1683 = vmatpush1.msra.mxu0 0.0
  %1684 = vmatprep.subr.mxu0 0.0
  %1685 = vmatpush1.msra.mxu0 0.0
  %1686 = vmatprep.subr.mxu0 0.0
  %1687 = vmatpush1.msra.mxu0 0.0
  %1688 = vmatprep.subr.mxu0 0.0
  %1689 = vmatpush1.msra.mxu0 0.0
  %1690 = vmatprep.subr.mxu0 0.0
  %1691 = vmatpush1.msra.mxu0 0.0
  %1692 = vmatprep.subr.mxu0 0.0
  %1693 = vmatpush1.msra.mxu0 0.0
  %1694 = vmatprep.subr.mxu0 0.0
  %1695 = vmatpush1.msra.mxu0 0.0
  %1696 = vmatprep.subr.mxu0 0.0
  %1697 = vmatpush1.msra.mxu0 0.0
  %1698 = vmatprep.subr.mxu0 0.0
  %1699 = vmatpush1.msra.mxu0 0.0
  %1700 = vmatprep.subr.mxu0 0.0
  %1701 = vmatpush1.msra.mxu0 0.0
  %1702 = vmatprep.subr.mxu0 0.0
  %1703 = vmatpush1.msra.mxu0 0.0
  %1704 = vmatprep.subr.mxu0 0.0
  %1705 = vmatpush1.msra.mxu0 0.0
  %1706 = vmatprep.mubr.f32.mxu0 0.0
  %1707 = vmatmul.mubr.f32.gmra.mrb[0].mxu0 %v1637
  %v1708 = vpop.f32.mrb[0].mxu0
  %v1709 = vadd.f32 0.0, %v1708
  %v1710 = vpop.f32.mrb[0].mxu0
  %1711 = vmatprep.mubr.f32.mxu0 0.0
  %1712 = vmatmul.mubr.f32.gmra.mrb[0].mxu0 %v1640
  %v1713 = vpop.f32.mrb[0].mxu0
  %v1714 = vadd.f32 0.0, %v1713
  %v1715 = vpop.f32.mrb[0].mxu0
  %1716 = vdwg.mxu0
  %v1718 = vsel %vm302, %v1234, 0
  %v1721 = vsel %vm302, %v1313, 0
  %1723 = vmatprep.subr.mxu0 0.0
  %1724 = vmatpush1.msra.mxu0 %v1633
  %1725 = vmatprep.subr.mxu0 0.0
  %1726 = vmatpush1.msra.mxu0 0.0
  %1727 = vmatprep.subr.mxu0 0.0
  %1728 = vmatpush1.msra.mxu0 0.0
  %1729 = vmatprep.subr.mxu0 0.0
  %1730 = vmatpush1.msra.mxu0 0.0
  %1731 = vmatprep.subr.mxu0 0.0
  %1732 = vmatpush1.msra.mxu0 0.0
  %1733 = vmatprep.subr.mxu0 0.0
  %1734 = vmatpush1.msra.mxu0 0.0
  %1735 = vmatprep.subr.mxu0 0.0
  %1736 = vmatpush1.msra.mxu0 0.0
  %1737 = vmatprep.subr.mxu0 0.0
  %1738 = vmatpush1.msra.mxu0 0.0
  %1739 = vmatprep.subr.mxu0 0.0
  %1740 = vmatpush1.msra.mxu0 0.0
  %1741 = vmatprep.subr.mxu0 0.0
  %1742 = vmatpush1.msra.mxu0 0.0
  %1743 = vmatprep.subr.mxu0 0.0
  %1744 = vmatpush1.msra.mxu0 0.0
  %1745 = vmatprep.subr.mxu0 0.0
  %1746 = vmatpush1.msra.mxu0 0.0
  %1747 = vmatprep.subr.mxu0 0.0
  %1748 = vmatpush1.msra.mxu0 0.0
  %1749 = vmatprep.subr.mxu0 0.0
  %1750 = vmatpush1.msra.mxu0 0.0
  %1751 = vmatprep.subr.mxu0 0.0
  %1752 = vmatpush1.msra.mxu0 0.0
  %1753 = vmatprep.subr.mxu0 0.0
  %1754 = vmatpush1.msra.mxu0 0.0
  %1755 = vmatprep.subr.mxu0 0.0
  %1756 = vmatpush1.msra.mxu0 0.0
  %1757 = vmatprep.subr.mxu0 0.0
  %1758 = vmatpush1.msra.mxu0 0.0
  %1759 = vmatprep.subr.mxu0 0.0
  %1760 = vmatpush1.msra.mxu0 0.0
  %1761 = vmatprep.subr.mxu0 0.0
  %1762 = vmatpush1.msra.mxu0 0.0
  %1763 = vmatprep.subr.mxu0 0.0
  %1764 = vmatpush1.msra.mxu0 0.0
  %1765 = vmatprep.subr.mxu0 0.0
  %1766 = vmatpush1.msra.mxu0 0.0
  %1767 = vmatprep.subr.mxu0 0.0
  %1768 = vmatpush1.msra.mxu0 0.0
  %1769 = vmatprep.subr.mxu0 0.0
  %1770 = vmatpush1.msra.mxu0 0.0
  %1771 = vmatprep.subr.mxu0 0.0
  %1772 = vmatpush1.msra.mxu0 0.0
  %1773 = vmatprep.subr.mxu0 0.0
  %1774 = vmatpush1.msra.mxu0 0.0
  %1775 = vmatprep.subr.mxu0 0.0
  %1776 = vmatpush1.msra.mxu0 0.0
  %1777 = vmatprep.subr.mxu0 0.0
  %1778 = vmatpush1.msra.mxu0 0.0
  %1779 = vmatprep.subr.mxu0 0.0
  %1780 = vmatpush1.msra.mxu0 0.0
  %1781 = vmatprep.subr.mxu0 0.0
  %1782 = vmatpush1.msra.mxu0 0.0
  %1783 = vmatprep.subr.mxu0 0.0
  %1784 = vmatpush1.msra.mxu0 0.0
  %1785 = vmatprep.subr.mxu0 0.0
  %1786 = vmatpush1.msra.mxu0 0.0
  %1787 = vmatprep.mubr.f32.mxu0 0.0
  %1788 = vmatmul.mubr.f32.gmra.mrb[0].mxu0 %v1718
  %v1789 = vpop.f32.mrb[0].mxu0
  %v1790 = vadd.f32 0.0, %v1789
  %v1791 = vpop.f32.mrb[0].mxu0
  %1792 = vmatprep.mubr.f32.mxu0 0.0
  %1793 = vmatmul.mubr.f32.gmra.mrb[0].mxu0 %v1721
  %v1794 = vpop.f32.mrb[0].mxu0
  %v1795 = vadd.f32 0.0, %v1794
  %v1796 = vpop.f32.mrb[0].mxu0
  %1797 = vdwg.mxu0
  %v1799 = vsel %vm302, %v1392, 0
  %v1802 = vsel %vm302, %v1471, 0
  %1804 = vmatprep.subr.mxu0 0.0
  %1805 = vmatpush1.msra.mxu0 %v1634
  %1806 = vmatprep.subr.mxu0 0.0
  %1807 = vmatpush1.msra.mxu0 0.0
  %1808 = vmatprep.subr.mxu0 0.0
  %1809 = vmatpush1.msra.mxu0 0.0
  %1810 = vmatprep.subr.mxu0 0.0
  %1811 = vmatpush1.msra.mxu0 0.0
  %1812 = vmatprep.subr.mxu0 0.0
  %1813 = vmatpush1.msra.mxu0 0.0
  %1814 = vmatprep.subr.mxu0 0.0
  %1815 = vmatpush1.msra.mxu0 0.0
  %1816 = vmatprep.subr.mxu0 0.0
  %1817 = vmatpush1.msra.mxu0 0.0
  %1818 = vmatprep.subr.mxu0 0.0
  %1819 = vmatpush1.msra.mxu0 0.0
  %1820 = vmatprep.subr.mxu0 0.0
  %1821 = vmatpush1.msra.mxu0 0.0
  %1822 = vmatprep.subr.mxu0 0.0
  %1823 = vmatpush1.msra.mxu0 0.0
  %1824 = vmatprep.subr.mxu0 0.0
  %1825 = vmatpush1.msra.mxu0 0.0
  %1826 = vmatprep.subr.mxu0 0.0
  %1827 = vmatpush1.msra.mxu0 0.0
  %1828 = vmatprep.subr.mxu0 0.0
  %1829 = vmatpush1.msra.mxu0 0.0
  %1830 = vmatprep.subr.mxu0 0.0
  %1831 = vmatpush1.msra.mxu0 0.0
  %1832 = vmatprep.subr.mxu0 0.0
  %1833 = vmatpush1.msra.mxu0 0.0
  %1834 = vmatprep.subr.mxu0 0.0
  %1835 = vmatpush1.msra.mxu0 0.0
  %1836 = vmatprep.subr.mxu0 0.0
  %1837 = vmatpush1.msra.mxu0 0.0
  %1838 = vmatprep.subr.mxu0 0.0
  %1839 = vmatpush1.msra.mxu0 0.0
  %1840 = vmatprep.subr.mxu0 0.0
  %1841 = vmatpush1.msra.mxu0 0.0
  %1842 = vmatprep.subr.mxu0 0.0
  %1843 = vmatpush1.msra.mxu0 0.0
  %1844 = vmatprep.subr.mxu0 0.0
  %1845 = vmatpush1.msra.mxu0 0.0
  %1846 = vmatprep.subr.mxu0 0.0
  %1847 = vmatpush1.msra.mxu0 0.0
  %1848 = vmatprep.subr.mxu0 0.0
  %1849 = vmatpush1.msra.mxu0 0.0
  %1850 = vmatprep.subr.mxu0 0.0
  %1851 = vmatpush1.msra.mxu0 0.0
  %1852 = vmatprep.subr.mxu0 0.0
  %1853 = vmatpush1.msra.mxu0 0.0
  %1854 = vmatprep.subr.mxu0 0.0
  %1855 = vmatpush1.msra.mxu0 0.0
  %1856 = vmatprep.subr.mxu0 0.0
  %1857 = vmatpush1.msra.mxu0 0.0
  %1858 = vmatprep.subr.mxu0 0.0
  %1859 = vmatpush1.msra.mxu0 0.0
  %1860 = vmatprep.subr.mxu0 0.0
  %1861 = vmatpush1.msra.mxu0 0.0
  %1862 = vmatprep.subr.mxu0 0.0
  %1863 = vmatpush1.msra.mxu0 0.0
  %1864 = vmatprep.subr.mxu0 0.0
  %1865 = vmatpush1.msra.mxu0 0.0
  %1866 = vmatprep.subr.mxu0 0.0
  %1867 = vmatpush1.msra.mxu0 0.0
  %1868 = vmatprep.mubr.f32.mxu0 0.0
  %1869 = vmatmul.mubr.f32.gmra.mrb[0].mxu0 %v1799
  %v1870 = vpop.f32.mrb[0].mxu0
  %v1871 = vadd.f32 0.0, %v1870
  %v1872 = vpop.f32.mrb[0].mxu0
  %1873 = vmatprep.mubr.f32.mxu0 0.0
  %1874 = vmatmul.mubr.f32.gmra.mrb[0].mxu0 %v1802
  %v1875 = vpop.f32.mrb[0].mxu0
  %v1876 = vadd.f32 0.0, %v1875
  %v1877 = vpop.f32.mrb[0].mxu0
  %1878 = vdwg.mxu0
  %v1880 = vsel %vm302, %v1550, 0
  %v1883 = vsel %vm302, %v1629, 0
  %1885 = vmatprep.subr.mxu0 0.0
  %1886 = vmatpush1.msra.mxu0 %v1635
  %1887 = vmatprep.subr.mxu0 0.0
  %1888 = vmatpush1.msra.mxu0 0.0
  %1889 = vmatprep.subr.mxu0 0.0
  %1890 = vmatpush1.msra.mxu0 0.0
  %1891 = vmatprep.subr.mxu0 0.0
  %1892 = vmatpush1.msra.mxu0 0.0
  %1893 = vmatprep.subr.mxu0 0.0
  %1894 = vmatpush1.msra.mxu0 0.0
  %1895 = vmatprep.subr.mxu0 0.0
  %1896 = vmatpush1.msra.mxu0 0.0
  %1897 = vmatprep.subr.mxu0 0.0
  %1898 = vmatpush1.msra.mxu0 0.0
  %1899 = vmatprep.subr.mxu0 0.0
  %1900 = vmatpush1.msra.mxu0 0.0
  %1901 = vmatprep.subr.mxu0 0.0
  %1902 = vmatpush1.msra.mxu0 0.0
  %1903 = vmatprep.subr.mxu0 0.0
  %1904 = vmatpush1.msra.mxu0 0.0
  %1905 = vmatprep.subr.mxu0 0.0
  %1906 = vmatpush1.msra.mxu0 0.0
  %1907 = vmatprep.subr.mxu0 0.0
  %1908 = vmatpush1.msra.mxu0 0.0
  %1909 = vmatprep.subr.mxu0 0.0
  %1910 = vmatpush1.msra.mxu0 0.0
  %1911 = vmatprep.subr.mxu0 0.0
  %1912 = vmatpush1.msra.mxu0 0.0
  %1913 = vmatprep.subr.mxu0 0.0
  %1914 = vmatpush1.msra.mxu0 0.0
  %1915 = vmatprep.subr.mxu0 0.0
  %1916 = vmatpush1.msra.mxu0 0.0
  %1917 = vmatprep.subr.mxu0 0.0
  %1918 = vmatpush1.msra.mxu0 0.0
  %1919 = vmatprep.subr.mxu0 0.0
  %1920 = vmatpush1.msra.mxu0 0.0
  %1921 = vmatprep.subr.mxu0 0.0
  %1922 = vmatpush1.msra.mxu0 0.0
  %1923 = vmatprep.subr.mxu0 0.0
  %1924 = vmatpush1.msra.mxu0 0.0
  %1925 = vmatprep.subr.mxu0 0.0
  %1926 = vmatpush1.msra.mxu0 0.0
  %1927 = vmatprep.subr.mxu0 0.0
  %1928 = vmatpush1.msra.mxu0 0.0
  %1929 = vmatprep.subr.mxu0 0.0
  %1930 = vmatpush1.msra.mxu0 0.0
  %1931 = vmatprep.subr.mxu0 0.0
  %1932 = vmatpush1.msra.mxu0 0.0
  %1933 = vmatprep.subr.mxu0 0.0
  %1934 = vmatpush1.msra.mxu0 0.0
  %1935 = vmatprep.subr.mxu0 0.0
  %1936 = vmatpush1.msra.mxu0 0.0
  %1937 = vmatprep.subr.mxu0 0.0
  %1938 = vmatpush1.msra.mxu0 0.0
  %1939 = vmatprep.subr.mxu0 0.0
  %1940 = vmatpush1.msra.mxu0 0.0
  %1941 = vmatprep.subr.mxu0 0.0
  %1942 = vmatpush1.msra.mxu0 0.0
  %1943 = vmatprep.subr.mxu0 0.0
  %1944 = vmatpush1.msra.mxu0 0.0
  %1945 = vmatprep.subr.mxu0 0.0
  %1946 = vmatpush1.msra.mxu0 0.0
  %1947 = vmatprep.subr.mxu0 0.0
  %1948 = vmatpush1.msra.mxu0 0.0
  %1949 = vmatprep.mubr.f32.mxu0 0.0
  %1950 = vmatmul.mubr.f32.gmra.mrb[0].mxu0 %v1880
  %v1951 = vpop.f32.mrb[0].mxu0
  %v1952 = vadd.f32 0.0, %v1951
  %v1953 = vpop.f32.mrb[0].mxu0
  %1954 = vmatprep.mubr.f32.mxu0 0.0
  %1955 = vmatmul.mubr.f32.gmra.mrb[0].mxu0 %v1883
  %v1956 = vpop.f32.mrb[0].mxu0
  %v1957 = vadd.f32 0.0, %v1956
  %v1958 = vpop.f32.mrb[0].mxu0
  %1959 = vdwg.mxu0
  %v1960 = vadd.f32 %v1709, %v1790
  %v1961 = vadd.f32 %v1714, %v1795
  %v1962 = vadd.f32 %v1960, %v1871
  %v1963 = vadd.f32 %v1961, %v1876
  %v1964 = vadd.f32 %v1962, %v1952
  %v1965 = vadd.f32 %v1963, %v1957
  %v1966 = vld [vmem:[%s7] sm:$0x1]
  %v1968 = vlaneseq
  %v1969 = vshrl.u32 %v1968, 7
  %v1970 = vsub.s32 0, %v1969
  %v1971 = vrot.slane %v1966, %v1970
  %v1973 = vadd.f32 %v1964, %v1971
  %v1974 = vadd.f32 %v1965, %v1971
  %v1975 = vadd.f32 %v53, %v1973
  %v1976 = vadd.f32 %v54, %v1974
  %v1977 = vld [vmem:[%s12] sm:$0x1]
  %v1978 = vld [vmem:[%s13] sm:$0x1]
  %v1979 = vsel %vm70, %v1975, 0.0
  %1980 = vadd.xlane.f32.xlu0 %v1979
  %v1981 = vpop.xlane.xlu0 %1980
  %v1982 = vsel %vm70, %v1976, 0.0
  %1983 = vadd.xlane.f32.xlu0 %v1982
  %v1984 = vpop.xlane.xlu0 %1983
  %v1985 = vrcp.pop 32.0
  %v1986 = vmul.f32 %v1981, %v1985
  %v1987 = vmul.f32 %v1984, %v1985
  %v1988 = vsub.f32 %v1975, %v1986
  %v1989 = vsub.f32 %v1976, %v1987
  %v1990 = vmul.f32 %v1988, %v1988
  %v1991 = vmul.f32 %v1989, %v1989
  %v1992 = vsel %vm70, %v1990, 0.0
  %1993 = vadd.xlane.f32.xlu0 %v1992
  %v1994 = vpop.xlane.xlu0 %1993
  %v1995 = vsel %vm70, %v1991, 0.0
  %1996 = vadd.xlane.f32.xlu0 %v1995
  %v1997 = vpop.xlane.xlu0 %1996
  %v1998 = vmul.f32 %v1994, %v1985
  %v1999 = vmul.f32 %v1997, %v1985
  %v2000 = vadd.f32 %v1998, 1e-05
  %v2001 = vadd.f32 %v1999, 1e-05
  %v2002 = vrsqrt.pop %v2000
  %v2003 = vrsqrt.pop %v2001
  %v2004 = vmul.f32 %v1988, %v2002
  %v2005 = vmul.f32 %v1989, %v2003
  %v2007 = vlaneseq
  %v2008 = vshrl.u32 %v2007, 7
  %v2009 = vsub.s32 0, %v2008
  %v2010 = vrot.slane %v1977, %v2009
  %v2012 = vmul.f32 %v2004, %v2010
  %v2013 = vmul.f32 %v2005, %v2010
  %v2015 = vlaneseq
  %v2016 = vshrl.u32 %v2015, 7
  %v2017 = vsub.s32 0, %v2016
  %v2018 = vrot.slane %v1978, %v2017
  %v2020 = vadd.f32 %v2012, %v2018
  %v2021 = vadd.f32 %v2013, %v2018
  %v2022 = vld [vmem:[%s8] sm:$0xff]
  %v2023 = vld [vmem:[%s8 + $0x8] sm:$0xff]
  %v2024 = vld [vmem:[%s8 + $0x10] sm:$0xff]
  %v2025 = vld [vmem:[%s8 + $0x18] sm:$0xff]
  %v2026 = vld [vmem:[%s9] sm:$0x1]
  %v2028 = vlaneseq
  %v2029 = vshrl.u32 %v2028, 7
  %v2030 = vsub.s32 0, %v2029
  %v2031 = vrot.slane %v2026, %v2030
  %v2034 = vsel %vm70, %v2020, 0
  %v2037 = vsel %vm70, %v2021, 0
  %2039 = vmatprep.subr.mxu0 0.0
  %2040 = vmatpush1.msra.mxu0 %v2022
  %2041 = vmatprep.subr.mxu0 0.0
  %2042 = vmatpush1.msra.mxu0 %v2023
  %2043 = vmatprep.subr.mxu0 0.0
  %2044 = vmatpush1.msra.mxu0 %v2024
  %2045 = vmatprep.subr.mxu0 0.0
  %2046 = vmatpush1.msra.mxu0 %v2025
  %2047 = vmatprep.subr.mxu0 0.0
  %2048 = vmatpush1.msra.mxu0 0.0
  %2049 = vmatprep.subr.mxu0 0.0
  %2050 = vmatpush1.msra.mxu0 0.0
  %2051 = vmatprep.subr.mxu0 0.0
  %2052 = vmatpush1.msra.mxu0 0.0
  %2053 = vmatprep.subr.mxu0 0.0
  %2054 = vmatpush1.msra.mxu0 0.0
  %2055 = vmatprep.subr.mxu0 0.0
  %2056 = vmatpush1.msra.mxu0 0.0
  %2057 = vmatprep.subr.mxu0 0.0
  %2058 = vmatpush1.msra.mxu0 0.0
  %2059 = vmatprep.subr.mxu0 0.0
  %2060 = vmatpush1.msra.mxu0 0.0
  %2061 = vmatprep.subr.mxu0 0.0
  %2062 = vmatpush1.msra.mxu0 0.0
  %2063 = vmatprep.subr.mxu0 0.0
  %2064 = vmatpush1.msra.mxu0 0.0
  %2065 = vmatprep.subr.mxu0 0.0
  %2066 = vmatpush1.msra.mxu0 0.0
  %2067 = vmatprep.subr.mxu0 0.0
  %2068 = vmatpush1.msra.mxu0 0.0
  %2069 = vmatprep.subr.mxu0 0.0
  %2070 = vmatpush1.msra.mxu0 0.0
  %2071 = vmatprep.subr.mxu0 0.0
  %2072 = vmatpush1.msra.mxu0 0.0
  %2073 = vmatprep.subr.mxu0 0.0
  %2074 = vmatpush1.msra.mxu0 0.0
  %2075 = vmatprep.subr.mxu0 0.0
  %2076 = vmatpush1.msra.mxu0 0.0
  %2077 = vmatprep.subr.mxu0 0.0
  %2078 = vmatpush1.msra.mxu0 0.0
  %2079 = vmatprep.subr.mxu0 0.0
  %2080 = vmatpush1.msra.mxu0 0.0
  %2081 = vmatprep.subr.mxu0 0.0
  %2082 = vmatpush1.msra.mxu0 0.0
  %2083 = vmatprep.subr.mxu0 0.0
  %2084 = vmatpush1.msra.mxu0 0.0
  %2085 = vmatprep.subr.mxu0 0.0
  %2086 = vmatpush1.msra.mxu0 0.0
  %2087 = vmatprep.subr.mxu0 0.0
  %2088 = vmatpush1.msra.mxu0 0.0
  %2089 = vmatprep.subr.mxu0 0.0
  %2090 = vmatpush1.msra.mxu0 0.0
  %2091 = vmatprep.subr.mxu0 0.0
  %2092 = vmatpush1.msra.mxu0 0.0
  %2093 = vmatprep.subr.mxu0 0.0
  %2094 = vmatpush1.msra.mxu0 0.0
  %2095 = vmatprep.subr.mxu0 0.0
  %2096 = vmatpush1.msra.mxu0 0.0
  %2097 = vmatprep.subr.mxu0 0.0
  %2098 = vmatpush1.msra.mxu0 0.0
  %2099 = vmatprep.subr.mxu0 0.0
  %2100 = vmatpush1.msra.mxu0 0.0
  %2101 = vmatprep.subr.mxu0 0.0
  %2102 = vmatpush1.msra.mxu0 0.0
  %2103 = vmatprep.mubr.f32.mxu0 0.0
  %2104 = vmatmul.mubr.f32.gmra.mrb[0].mxu0 %v2034
  %v2105 = vpop.f32.mrb[0].mxu0
  %v2106 = vadd.f32 %v2031, %v2105
  %v2107 = vpop.f32.mrb[0].mxu0
  %2108 = vmatprep.mubr.f32.mxu0 0.0
  %2109 = vmatmul.mubr.f32.gmra.mrb[0].mxu0 %v2037
  %v2110 = vpop.f32.mrb[0].mxu0
  %v2111 = vadd.f32 %v2031, %v2110
  %v2112 = vpop.f32.mrb[0].mxu0
  %2113 = vdwg.mxu0
  %v2114 = vmax.f32 %v2106, 0.0
  %v2115 = vmax.f32 %v2111, 0.0
  %v2116 = vld [vmem:[%s10] sm:$0xff]
  %v2117 = vld [vmem:[%s10 + $0x8] sm:$0xff]
  %v2118 = vld [vmem:[%s10 + $0x10] sm:$0xff]
  %v2119 = vld [vmem:[%s10 + $0x18] sm:$0xff]
  %v2120 = vld [vmem:[%s10 + $0x20] sm:$0xff]
  %v2121 = vld [vmem:[%s10 + $0x28] sm:$0xff]
  %v2122 = vld [vmem:[%s10 + $0x30] sm:$0xff]
  %v2123 = vld [vmem:[%s10 + $0x38] sm:$0xff]
  %v2124 = vld [vmem:[%s11] sm:$0x1]
  %v2126 = vlaneseq
  %v2127 = vshrl.u32 %v2126, 7
  %v2128 = vsub.s32 0, %v2127
  %v2129 = vrot.slane %v2124, %v2128
  %vm2131 = vcmask 523264
  %v2133 = vsel %vm2131, %v2114, 0
  %v2136 = vsel %vm2131, %v2115, 0
  %2138 = vmatprep.subr.mxu0 0.0
  %2139 = vmatpush1.msra.mxu0 %v2116
  %2140 = vmatprep.subr.mxu0 0.0
  %2141 = vmatpush1.msra.mxu0 %v2117
  %2142 = vmatprep.subr.mxu0 0.0
  %2143 = vmatpush1.msra.mxu0 %v2118
  %2144 = vmatprep.subr.mxu0 0.0
  %2145 = vmatpush1.msra.mxu0 %v2119
  %2146 = vmatprep.subr.mxu0 0.0
  %2147 = vmatpush1.msra.mxu0 %v2120
  %2148 = vmatprep.subr.mxu0 0.0
  %2149 = vmatpush1.msra.mxu0 %v2121
  %2150 = vmatprep.subr.mxu0 0.0
  %2151 = vmatpush1.msra.mxu0 %v2122
  %2152 = vmatprep.subr.mxu0 0.0
  %2153 = vmatpush1.msra.mxu0 %v2123
  %2154 = vmatprep.subr.mxu0 0.0
  %2155 = vmatpush1.msra.mxu0 0.0
  %2156 = vmatprep.subr.mxu0 0.0
  %2157 = vmatpush1.msra.mxu0 0.0
  %2158 = vmatprep.subr.mxu0 0.0
  %2159 = vmatpush1.msra.mxu0 0.0
  %2160 = vmatprep.subr.mxu0 0.0
  %2161 = vmatpush1.msra.mxu0 0.0
  %2162 = vmatprep.subr.mxu0 0.0
  %2163 = vmatpush1.msra.mxu0 0.0
  %2164 = vmatprep.subr.mxu0 0.0
  %2165 = vmatpush1.msra.mxu0 0.0
  %2166 = vmatprep.subr.mxu0 0.0
  %2167 = vmatpush1.msra.mxu0 0.0
  %2168 = vmatprep.subr.mxu0 0.0
  %2169 = vmatpush1.msra.mxu0 0.0
  %2170 = vmatprep.subr.mxu0 0.0
  %2171 = vmatpush1.msra.mxu0 0.0
  %2172 = vmatprep.subr.mxu0 0.0
  %2173 = vmatpush1.msra.mxu0 0.0
  %2174 = vmatprep.subr.mxu0 0.0
  %2175 = vmatpush1.msra.mxu0 0.0
  %2176 = vmatprep.subr.mxu0 0.0
  %2177 = vmatpush1.msra.mxu0 0.0
  %2178 = vmatprep.subr.mxu0 0.0
  %2179 = vmatpush1.msra.mxu0 0.0
  %2180 = vmatprep.subr.mxu0 0.0
  %2181 = vmatpush1.msra.mxu0 0.0
  %2182 = vmatprep.subr.mxu0 0.0
  %2183 = vmatpush1.msra.mxu0 0.0
  %2184 = vmatprep.subr.mxu0 0.0
  %2185 = vmatpush1.msra.mxu0 0.0
  %2186 = vmatprep.subr.mxu0 0.0
  %2187 = vmatpush1.msra.mxu0 0.0
  %2188 = vmatprep.subr.mxu0 0.0
  %2189 = vmatpush1.msra.mxu0 0.0
  %2190 = vmatprep.subr.mxu0 0.0
  %2191 = vmatpush1.msra.mxu0 0.0
  %2192 = vmatprep.subr.mxu0 0.0
  %2193 = vmatpush1.msra.mxu0 0.0
  %2194 = vmatprep.subr.mxu0 0.0
  %2195 = vmatpush1.msra.mxu0 0.0
  %2196 = vmatprep.subr.mxu0 0.0
  %2197 = vmatpush1.msra.mxu0 0.0
  %2198 = vmatprep.subr.mxu0 0.0
  %2199 = vmatpush1.msra.mxu0 0.0
  %2200 = vmatprep.subr.mxu0 0.0
  %2201 = vmatpush1.msra.mxu0 0.0
  %2202 = vmatprep.mubr.f32.mxu0 0.0
  %2203 = vmatmul.mubr.f32.gmra.mrb[0].mxu0 %v2133
  %v2204 = vpop.f32.mrb[0].mxu0
  %v2205 = vadd.f32 %v2129, %v2204
  %v2206 = vpop.f32.mrb[0].mxu0
  %2207 = vmatprep.mubr.f32.mxu0 0.0
  %2208 = vmatmul.mubr.f32.gmra.mrb[0].mxu0 %v2136
  %v2209 = vpop.f32.mrb[0].mxu0
  %v2210 = vadd.f32 %v2129, %v2209
  %v2211 = vpop.f32.mrb[0].mxu0
  %2212 = vdwg.mxu0
  %v2213 = vadd.f32 %v2020, %v2205
  %v2214 = vadd.f32 %v2021, %v2210
  %v2215 = vld [vmem:[%s14] sm:$0x1]
  %v2216 = vld [vmem:[%s15] sm:$0x1]
  %v2217 = vsel %vm70, %v2213, 0.0
  %2218 = vadd.xlane.f32.xlu0 %v2217
  %v2219 = vpop.xlane.xlu0 %2218
  %v2220 = vsel %vm70, %v2214, 0.0
  %2221 = vadd.xlane.f32.xlu0 %v2220
  %v2222 = vpop.xlane.xlu0 %2221
  %v2223 = vmul.f32 %v2219, %v1985
  %v2224 = vmul.f32 %v2222, %v1985
  %v2225 = vsub.f32 %v2213, %v2223
  %v2226 = vsub.f32 %v2214, %v2224
  %v2227 = vmul.f32 %v2225, %v2225
  %v2228 = vmul.f32 %v2226, %v2226
  %v2229 = vsel %vm70, %v2227, 0.0
  %2230 = vadd.xlane.f32.xlu0 %v2229
  %v2231 = vpop.xlane.xlu0 %2230
  %v2232 = vsel %vm70, %v2228, 0.0
  %2233 = vadd.xlane.f32.xlu0 %v2232
  %v2234 = vpop.xlane.xlu0 %2233
  %v2235 = vmul.f32 %v2231, %v1985
  %v2236 = vmul.f32 %v2234, %v1985
  %v2237 = vadd.f32 %v2235, 1e-05
  %v2238 = vadd.f32 %v2236, 1e-05
  %v2239 = vrsqrt.pop %v2237
  %v2240 = vrsqrt.pop %v2238
  %v2241 = vmul.f32 %v2225, %v2239
  %v2242 = vmul.f32 %v2226, %v2240
  %v2244 = vlaneseq
  %v2245 = vshrl.u32 %v2244, 7
  %v2246 = vsub.s32 0, %v2245
  %v2247 = vrot.slane %v2215, %v2246
  %v2249 = vmul.f32 %v2241, %v2247
  %v2250 = vmul.f32 %v2242, %v2247
  %v2252 = vlaneseq
  %v2253 = vshrl.u32 %v2252, 7
  %v2254 = vsub.s32 0, %v2253
  %v2255 = vrot.slane %v2216, %v2254
  %v2257 = vadd.f32 %v2249, %v2255
  %v2258 = vadd.f32 %v2250, %v2255
  %2259 = vst.msk [vmem:[%s16] sm:$0xff] %vm70, %v2257
  %2260 = vst.msk [vmem:[%s16 + $0x8] sm:$0xff] %vm70, %v2258
  // Predicated region
  $region66: #{_decoder_layer_impl.1} parent=0 // pred_check
    _
  $region67: #{_decoder_layer_impl.1} parent=0 // pred_check_branch
    %2262 = sbr.rel (0) target = $region69
  $region68: #{_decoder_layer_impl.1} parent=0 // pred_region
    _
  $region69: #{_decoder_layer_impl.1} parent=0 // pred_fallthru
    _
  // Predicated region
  $region70: #{_decoder_layer_impl.1} parent=0 // pred_check
    _
  $region71: #{_decoder_layer_impl.1} parent=0 // pred_check_branch
    %2264 = sbr.rel (0) target = $region73
  $region72: #{_decoder_layer_impl.1} parent=0 // pred_region
    _
  $region73: #{_decoder_layer_impl.1} parent=0 // pred_fallthru
    _

</llo_original>
